<compile_context>
chip_gen: v7x
topology: tpu7x:2x2x1
jax: 0.10.0
libtpu: 0.0.40
codegen_flags: <defaults>
</compile_context>

<pallas_src>
import functools

import jax
import jax.numpy as jnp
from jax.experimental import pallas as pl
from jax.experimental.pallas import tpu as pltpu


D_IN = 784   # 28 * 28
D_H = 200    # logical hidden width
D_Z = 50     # logical latent width

# Lane-aligned padded widths used inside the kernel.
D_HP = 256        # 200 -> 256
D_ZP = 128        # 50  -> 128
D_SP = 2 * D_ZP   # fused mu || logstd width (256)


def _cdiv(a, b):
    return -(-a // b)


def _round_up(x, m):
    return _cdiv(x, m) * m


def _choose_bm(B, block_m):
    """Batch tile: minimize tail padding, guarantee >=2 grid steps when B > 8."""
    if B <= 8:
        return 8
    n_steps = max(2, _cdiv(B, block_m))
    return min(block_m, _round_up(_cdiv(B, n_steps), 8))


def _vae_forward_kernel(
    x_ref, eps_ref,
    w1_ref, b1_ref, w2_ref, b2_ref,
    w3_ref, b3_ref,                       # fused mu||logstd head
    w4_ref, b4_ref, w5_ref, b5_ref, w6_ref, b6_ref,
    dec_ref, stats_ref,
):
    f32 = jnp.float32
    bf16 = jnp.bfloat16

    def dense(a_bf16, w_ref, b_ref):
        # bf16 MXU matmul with f32 accumulation; bias add in f32.
        return jnp.dot(a_bf16, w_ref[...], preferred_element_type=f32) + b_ref[...]

    x = x_ref[...]                                   # [bm, 784] bf16 (cast in wrapper)

    # ---- encode ----
    h1 = jnp.tanh(dense(x, w1_ref, b1_ref))                    # [bm, 256] f32
    h2 = jnp.tanh(dense(h1.astype(bf16), w2_ref, b2_ref))      # [bm, 256] f32
    stats = dense(h2.astype(bf16), w3_ref, b3_ref)             # [bm, 256] = mu || logstd
    mu = stats[:, :D_ZP]                                       # [bm, 128] (cols >= 50 are 0)
    logstd = stats[:, D_ZP:]                                   # [bm, 128]

    # ---- reparameterize: z = mu + eps * exp(logstd) ----
    # eps is zero in the padded lanes (50..127), so padded z stays exactly 0.
    z = mu + eps_ref[...] * jnp.exp(logstd)                    # [bm, 128]

    # ---- decode ----
    h3 = jnp.tanh(dense(z.astype(bf16), w4_ref, b4_ref))       # [bm, 256]
    h4 = jnp.tanh(dense(h3.astype(bf16), w5_ref, b5_ref))      # [bm, 256]
    logits = dense(h4.astype(bf16), w6_ref, b6_ref)            # [bm, 784]

    dec_ref[...] = jax.nn.sigmoid(logits)
    stats_ref[...] = stats


def init_params(key):
    """PyTorch-Linear-like init (U[-1/sqrt(in), 1/sqrt(in)]), weights (in, out)."""
    layer_dims = {
        "1": (D_IN, D_H),
        "2": (D_H, D_H),
        "31": (D_H, D_Z),
        "32": (D_H, D_Z),
        "4": (D_Z, D_H),
        "5": (D_H, D_H),
        "6": (D_H, D_IN),
    }
    params = {}
    for name, (d_in, d_out) in layer_dims.items():
        key, kw, kb = jax.random.split(key, 3)
        bound = 1.0 / jnp.sqrt(jnp.float32(d_in))
        params[f"w{name}"] = jax.random.uniform(
            kw, (d_in, d_out), jnp.float32, -bound, bound)
        params[f"b{name}"] = jax.random.uniform(
            kb, (1, d_out), jnp.float32, -bound, bound)
    return params


def prepare_params(params):
    """Zero-pad to lane-aligned widths, fuse the mu/logstd head, cast weights to bf16."""
    def pad_w(w, din_p, dout_p):
        din, dout = w.shape
        wp = jnp.zeros((din_p, dout_p), jnp.float32).at[:din, :dout].set(w)
        return wp.astype(jnp.bfloat16)

    def pad_b(b, dout_p):
        b = b.reshape(1, -1)
        return jnp.zeros((1, dout_p), jnp.float32).at[:, :b.shape[1]].set(b)

    w31 = pad_w(params["w31"], D_HP, D_ZP)
    w32 = pad_w(params["w32"], D_HP, D_ZP)
    b31 = pad_b(params["b31"], D_ZP)
    b32 = pad_b(params["b32"], D_ZP)
    return {
        "w1": pad_w(params["w1"], D_IN, D_HP), "b1": pad_b(params["b1"], D_HP),
        "w2": pad_w(params["w2"], D_HP, D_HP), "b2": pad_b(params["b2"], D_HP),
        "w3": jnp.concatenate([w31, w32], axis=1),           # (256, 256) bf16
        "b3": jnp.concatenate([b31, b32], axis=1),           # (1, 256) f32
        "w4": pad_w(params["w4"], D_ZP, D_HP), "b4": pad_b(params["b4"], D_HP),
        "w5": pad_w(params["w5"], D_HP, D_HP), "b5": pad_b(params["b5"], D_HP),
        "w6": pad_w(params["w6"], D_HP, D_IN), "b6": pad_b(params["b6"], D_IN),
    }


@functools.partial(jax.jit, static_argnames=("block_m",))
def mnist1_forward(x_nchw, eps, prepared, block_m=1024):
    """Forward of mnist1_model.

    Args:
      x_nchw:   [B, 1, 28, 28] images.
      eps:      [B, 50] standard-normal noise (torch.randn_like stand-in).
      prepared: output of prepare_params().
      block_m:  max batch tile.

    Returns:
      (decoded [B, 784] f32, mu [B, 50] f32, logstd [B, 50] f32)
    """
    B = x_nchw.shape[0]
    # x.view(-1, 784); streamed as bf16 (halves the dominant HBM input stream).
    x = x_nchw.reshape(B, D_IN).astype(jnp.bfloat16)
    # eps lane-pad (cols 50..127) MUST be zero: padded z lanes then stay exactly 0
    # and cannot poison the zero rows of w4 (0 * Inf = NaN hazard otherwise).
    eps_p = jnp.zeros((B, D_ZP), jnp.float32).at[:, :D_Z].set(
        eps.astype(jnp.float32))

    bm = _choose_bm(B, block_m)
    grid_m = _cdiv(B, bm)          # ragged tail block is masked by Pallas

    p = prepared
    args = (
        x, eps_p,
        p["w1"], p["b1"], p["w2"], p["b2"], p["w3"], p["b3"],
        p["w4"], p["b4"], p["w5"], p["b5"], p["w6"], p["b6"],
    )

    row = lambda i: (i, 0)      # batch-tiled operands
    const = lambda i: (0, 0)    # weights/biases resident across grid steps

    in_specs = [
        pl.BlockSpec((bm, D_IN), row),
        pl.BlockSpec((bm, D_ZP), row),
        pl.BlockSpec((D_IN, D_HP), const), pl.BlockSpec((1, D_HP), const),
        pl.BlockSpec((D_HP, D_HP), const), pl.BlockSpec((1, D_HP), const),
        pl.BlockSpec((D_HP, D_SP), const), pl.BlockSpec((1, D_SP), const),
        pl.BlockSpec((D_ZP, D_HP), const), pl.BlockSpec((1, D_HP), const),
        pl.BlockSpec((D_HP, D_HP), const), pl.BlockSpec((1, D_HP), const),
        pl.BlockSpec((D_HP, D_IN), const), pl.BlockSpec((1, D_IN), const),
    ]
    out_specs = (
        pl.BlockSpec((bm, D_IN), row),
        pl.BlockSpec((bm, D_SP), row),
    )

    flops = 2 * B * (D_IN * D_HP + D_HP * D_HP + D_HP * D_SP
                     + D_ZP * D_HP + D_HP * D_HP + D_HP * D_IN)
    transcendentals = B * (4 * D_HP + D_ZP + D_IN)
    bytes_accessed = (sum(int(a.size) * a.dtype.itemsize for a in args)
                      + B * (D_IN * 4 + D_SP * 4))

    dec, stats = pl.pallas_call(
        _vae_forward_kernel,
        out_shape=(
            jax.ShapeDtypeStruct((B, D_IN), jnp.float32),
            jax.ShapeDtypeStruct((B, D_SP), jnp.float32),
        ),
        grid=(grid_m,),
        in_specs=in_specs,
        out_specs=out_specs,
        compiler_params=pltpu.CompilerParams(
            dimension_semantics=("parallel",),
            vmem_limit_bytes=56 * 1024 * 1024),
        cost_estimate=pl.CostEstimate(
            flops=flops,
            transcendentals=transcendentals,
            bytes_accessed=bytes_accessed),
    )(*args)

    mu = stats[:, :D_Z]
    logstd = stats[:, D_ZP:D_ZP + D_Z]
    return dec, mu, logstd


def reference_forward(x_nchw, eps, prepared):
    """Pure-JAX reference using the same padded/fused bf16 weights (validation)."""
    B = x_nchw.shape[0]
    x = x_nchw.reshape(B, D_IN).astype(jnp.bfloat16)
    eps_p = jnp.zeros((B, D_ZP), jnp.float32).at[:, :D_Z].set(
        eps.astype(jnp.float32))
    p = prepared

    def dense(a, w, b):
        return jnp.dot(a.astype(jnp.bfloat16), w,
                       preferred_element_type=jnp.float32) + b

    h1 = jnp.tanh(dense(x, p["w1"], p["b1"]))
    h2 = jnp.tanh(dense(h1, p["w2"], p["b2"]))
    stats = dense(h2, p["w3"], p["b3"])
    mu, logstd = stats[:, :D_ZP], stats[:, D_ZP:]
    z = mu + eps_p * jnp.exp(logstd)
    h3 = jnp.tanh(dense(z, p["w4"], p["b4"]))
    h4 = jnp.tanh(dense(h3, p["w5"], p["b5"]))
    dec = jax.nn.sigmoid(dense(h4, p["w6"], p["b6"]))
    return dec, mu[:, :D_Z], logstd[:, :D_Z]


if __name__ == "__main__":
    key = jax.random.PRNGKey(0)
    k_params, k_x, k_eps = jax.random.split(key, 3)

    params = init_params(k_params)
    prepared = prepare_params(params)

    # Small, single-tile case.
    B = 8
    x = jax.random.uniform(k_x, (B, 1, 28, 28), jnp.float32)   # MNIST-like in [0,1)
    eps = jax.random.normal(k_eps, (B, D_Z), jnp.float32)      # randn_like stand-in

    dec, mu, logstd = mnist1_forward(x, eps, prepared)
    jax.block_until_ready((dec, mu, logstd))

    assert dec.shape == (B, D_IN)
    assert mu.shape == (B, D_Z)
    assert logstd.shape == (B, D_Z)

    ref_dec, ref_mu, ref_logstd = reference_forward(x, eps, prepared)
    assert jnp.allclose(dec, ref_dec, rtol=2e-2, atol=2e-2)
    assert jnp.allclose(mu, ref_mu, rtol=2e-2, atol=2e-2)
    assert jnp.allclose(logstd, ref_logstd, rtol=2e-2, atol=2e-2)

    # Multi-step, ragged-grid case (exercises batch tiling + masked tail block).
    B2 = 20
    k_x2, k_e2 = jax.random.split(k_x)
    x2 = jax.random.uniform(k_x2, (B2, 1, 28, 28), jnp.float32)
    eps2 = jax.random.normal(k_e2, (B2, D_Z), jnp.float32)
    dec2, mu2, ls2 = mnist1_forward(x2, eps2, prepared, block_m=8)
    jax.block_until_ready((dec2, mu2, ls2))
    r_dec2, r_mu2, r_ls2 = reference_forward(x2, eps2, prepared)
    assert jnp.allclose(dec2, r_dec2, rtol=2e-2, atol=2e-2)
    assert jnp.allclose(mu2, r_mu2, rtol=2e-2, atol=2e-2)
    assert jnp.allclose(ls2, r_ls2, rtol=2e-2, atol=2e-2)

    print("KERNEL_OK")
</pallas_src>

<mosaic_0001>
module attributes {stable_mosaic.version = 11 : i64} {
  func.func @_vae_forward_kernel(%arg0: i32, %arg1: memref<8x784xbf16, #tpu.memory_space<vmem>>, %arg2: memref<8x128xf32, #tpu.memory_space<vmem>>, %arg3: memref<784x256xbf16, #tpu.memory_space<vmem>>, %arg4: memref<1x256xf32, #tpu.memory_space<vmem>>, %arg5: memref<256x256xbf16, #tpu.memory_space<vmem>>, %arg6: memref<1x256xf32, #tpu.memory_space<vmem>>, %arg7: memref<256x256xbf16, #tpu.memory_space<vmem>>, %arg8: memref<1x256xf32, #tpu.memory_space<vmem>>, %arg9: memref<128x256xbf16, #tpu.memory_space<vmem>>, %arg10: memref<1x256xf32, #tpu.memory_space<vmem>>, %arg11: memref<256x256xbf16, #tpu.memory_space<vmem>>, %arg12: memref<1x256xf32, #tpu.memory_space<vmem>>, %arg13: memref<256x784xbf16, #tpu.memory_space<vmem>>, %arg14: memref<1x784xf32, #tpu.memory_space<vmem>>, %arg15: memref<8x784xf32, #tpu.memory_space<vmem>>, %arg16: memref<8x256xf32, #tpu.memory_space<vmem>>) attributes {dimension_semantics = [#tpu.dimension_semantics<parallel>], iteration_bounds = array<i64: 1>, scalar_prefetch = 0 : i64, scratch_operands = 0 : i64, tpu.core_type = #tpu.core_type<tc>, window_params = [{transform_indices = @transform_0, window_bounds = array<i64: 8, 784>}, {transform_indices = @transform_1, window_bounds = array<i64: 8, 128>}, {pipeline_mode = #tpu.pipeline_mode<synchronous>, transform_indices = @transform_2, window_bounds = array<i64: 784, 256>}, {pipeline_mode = #tpu.pipeline_mode<synchronous>, transform_indices = @transform_3, window_bounds = array<i64: 1, 256>}, {pipeline_mode = #tpu.pipeline_mode<synchronous>, transform_indices = @transform_4, window_bounds = array<i64: 256, 256>}, {pipeline_mode = #tpu.pipeline_mode<synchronous>, transform_indices = @transform_5, window_bounds = array<i64: 1, 256>}, {pipeline_mode = #tpu.pipeline_mode<synchronous>, transform_indices = @transform_6, window_bounds = array<i64: 256, 256>}, {pipeline_mode = #tpu.pipeline_mode<synchronous>, transform_indices = @transform_7, window_bounds = array<i64: 1, 256>}, {pipeline_mode = #tpu.pipeline_mode<synchronous>, transform_indices = @transform_8, window_bounds = array<i64: 128, 256>}, {pipeline_mode = #tpu.pipeline_mode<synchronous>, transform_indices = @transform_9, window_bounds = array<i64: 1, 256>}, {pipeline_mode = #tpu.pipeline_mode<synchronous>, transform_indices = @transform_10, window_bounds = array<i64: 256, 256>}, {pipeline_mode = #tpu.pipeline_mode<synchronous>, transform_indices = @transform_11, window_bounds = array<i64: 1, 256>}, {pipeline_mode = #tpu.pipeline_mode<synchronous>, transform_indices = @transform_12, window_bounds = array<i64: 256, 784>}, {pipeline_mode = #tpu.pipeline_mode<synchronous>, transform_indices = @transform_13, window_bounds = array<i64: 1, 784>}, {transform_indices = @transform_14, window_bounds = array<i64: 8, 784>}, {transform_indices = @transform_15, window_bounds = array<i64: 8, 256>}]} {
    %c0 = arith.constant 0 : index
    %c0_0 = arith.constant 0 : index
    %0 = vector.load %arg1[%c0, %c0_0] : memref<8x784xbf16, #tpu.memory_space<vmem>>, vector<8x784xbf16>
    %c0_1 = arith.constant 0 : index
    %c0_2 = arith.constant 0 : index
    %1 = vector.load %arg3[%c0_1, %c0_2] : memref<784x256xbf16, #tpu.memory_space<vmem>>, vector<784x256xbf16>
    %cst = arith.constant dense<0.000000e+00> : vector<8x256xf32>
    %2 = tpu.matmul %0, %1, %cst {dimension_numbers = #tpu.dot_dimension_numbers<[1], [0], [0], [1], [0, 0, 1, 1], [], []>} : vector<8x784xbf16>, vector<784x256xbf16>, vector<8x256xf32> -> vector<8x256xf32>
    %c0_3 = arith.constant 0 : index
    %c0_4 = arith.constant 0 : index
    %3 = vector.load %arg4[%c0_3, %c0_4] : memref<1x256xf32, #tpu.memory_space<vmem>>, vector<1x256xf32>
    %4 = vector.broadcast %3 : vector<1x256xf32> to vector<8x256xf32>
    %5 = arith.addf %2, %4 : vector<8x256xf32>
    %6 = math.tanh %5 : vector<8x256xf32>
    %7 = arith.truncf %6 : vector<8x256xf32> to vector<8x256xbf16>
    %c0_5 = arith.constant 0 : index
    %c0_6 = arith.constant 0 : index
    %8 = vector.load %arg5[%c0_5, %c0_6] : memref<256x256xbf16, #tpu.memory_space<vmem>>, vector<256x256xbf16>
    %cst_7 = arith.constant dense<0.000000e+00> : vector<8x256xf32>
    %9 = tpu.matmul %7, %8, %cst_7 {dimension_numbers = #tpu.dot_dimension_numbers<[1], [0], [0], [1], [0, 0, 1, 1], [], []>} : vector<8x256xbf16>, vector<256x256xbf16>, vector<8x256xf32> -> vector<8x256xf32>
    %c0_8 = arith.constant 0 : index
    %c0_9 = arith.constant 0 : index
    %10 = vector.load %arg6[%c0_8, %c0_9] : memref<1x256xf32, #tpu.memory_space<vmem>>, vector<1x256xf32>
    %11 = vector.broadcast %10 : vector<1x256xf32> to vector<8x256xf32>
    %12 = arith.addf %9, %11 : vector<8x256xf32>
    %13 = math.tanh %12 : vector<8x256xf32>
    %14 = arith.truncf %13 : vector<8x256xf32> to vector<8x256xbf16>
    %c0_10 = arith.constant 0 : index
    %c0_11 = arith.constant 0 : index
    %15 = vector.load %arg7[%c0_10, %c0_11] : memref<256x256xbf16, #tpu.memory_space<vmem>>, vector<256x256xbf16>
    %cst_12 = arith.constant dense<0.000000e+00> : vector<8x256xf32>
    %16 = tpu.matmul %14, %15, %cst_12 {dimension_numbers = #tpu.dot_dimension_numbers<[1], [0], [0], [1], [0, 0, 1, 1], [], []>} : vector<8x256xbf16>, vector<256x256xbf16>, vector<8x256xf32> -> vector<8x256xf32>
    %c0_13 = arith.constant 0 : index
    %c0_14 = arith.constant 0 : index
    %17 = vector.load %arg8[%c0_13, %c0_14] : memref<1x256xf32, #tpu.memory_space<vmem>>, vector<1x256xf32>
    %18 = vector.broadcast %17 : vector<1x256xf32> to vector<8x256xf32>
    %19 = arith.addf %16, %18 : vector<8x256xf32>
    %20 = vector.extract_strided_slice %19 {offsets = [0, 0], sizes = [8, 128], strides = [1, 1]} : vector<8x256xf32> to vector<8x128xf32>
    %21 = vector.extract_strided_slice %19 {offsets = [0, 128], sizes = [8, 128], strides = [1, 1]} : vector<8x256xf32> to vector<8x128xf32>
    %c0_15 = arith.constant 0 : index
    %c0_16 = arith.constant 0 : index
    %22 = vector.load %arg2[%c0_15, %c0_16] : memref<8x128xf32, #tpu.memory_space<vmem>>, vector<8x128xf32>
    %23 = math.exp %21 : vector<8x128xf32>
    %24 = arith.mulf %22, %23 : vector<8x128xf32>
    %25 = arith.addf %20, %24 : vector<8x128xf32>
    %26 = arith.truncf %25 : vector<8x128xf32> to vector<8x128xbf16>
    %c0_17 = arith.constant 0 : index
    %c0_18 = arith.constant 0 : index
    %27 = vector.load %arg9[%c0_17, %c0_18] : memref<128x256xbf16, #tpu.memory_space<vmem>>, vector<128x256xbf16>
    %cst_19 = arith.constant dense<0.000000e+00> : vector<8x256xf32>
    %28 = tpu.matmul %26, %27, %cst_19 {dimension_numbers = #tpu.dot_dimension_numbers<[1], [0], [0], [1], [0, 0, 1, 1], [], []>} : vector<8x128xbf16>, vector<128x256xbf16>, vector<8x256xf32> -> vector<8x256xf32>
    %c0_20 = arith.constant 0 : index
    %c0_21 = arith.constant 0 : index
    %29 = vector.load %arg10[%c0_20, %c0_21] : memref<1x256xf32, #tpu.memory_space<vmem>>, vector<1x256xf32>
    %30 = vector.broadcast %29 : vector<1x256xf32> to vector<8x256xf32>
    %31 = arith.addf %28, %30 : vector<8x256xf32>
    %32 = math.tanh %31 : vector<8x256xf32>
    %33 = arith.truncf %32 : vector<8x256xf32> to vector<8x256xbf16>
    %c0_22 = arith.constant 0 : index
    %c0_23 = arith.constant 0 : index
    %34 = vector.load %arg11[%c0_22, %c0_23] : memref<256x256xbf16, #tpu.memory_space<vmem>>, vector<256x256xbf16>
    %cst_24 = arith.constant dense<0.000000e+00> : vector<8x256xf32>
    %35 = tpu.matmul %33, %34, %cst_24 {dimension_numbers = #tpu.dot_dimension_numbers<[1], [0], [0], [1], [0, 0, 1, 1], [], []>} : vector<8x256xbf16>, vector<256x256xbf16>, vector<8x256xf32> -> vector<8x256xf32>
    %c0_25 = arith.constant 0 : index
    %c0_26 = arith.constant 0 : index
    %36 = vector.load %arg12[%c0_25, %c0_26] : memref<1x256xf32, #tpu.memory_space<vmem>>, vector<1x256xf32>
    %37 = vector.broadcast %36 : vector<1x256xf32> to vector<8x256xf32>
    %38 = arith.addf %35, %37 : vector<8x256xf32>
    %39 = math.tanh %38 : vector<8x256xf32>
    %40 = arith.truncf %39 : vector<8x256xf32> to vector<8x256xbf16>
    %c0_27 = arith.constant 0 : index
    %c0_28 = arith.constant 0 : index
    %41 = vector.load %arg13[%c0_27, %c0_28] : memref<256x784xbf16, #tpu.memory_space<vmem>>, vector<256x784xbf16>
    %cst_29 = arith.constant dense<0.000000e+00> : vector<8x784xf32>
    %42 = tpu.matmul %40, %41, %cst_29 {dimension_numbers = #tpu.dot_dimension_numbers<[1], [0], [0], [1], [0, 0, 1, 1], [], []>} : vector<8x256xbf16>, vector<256x784xbf16>, vector<8x784xf32> -> vector<8x784xf32>
    %c0_30 = arith.constant 0 : index
    %c0_31 = arith.constant 0 : index
    %43 = vector.load %arg14[%c0_30, %c0_31] : memref<1x784xf32, #tpu.memory_space<vmem>>, vector<1x784xf32>
    %44 = vector.broadcast %43 : vector<1x784xf32> to vector<8x784xf32>
    %45 = arith.addf %42, %44 : vector<8x784xf32>
    %46 = arith.negf %45 : vector<8x784xf32>
    %47 = math.exp %46 : vector<8x784xf32>
    %cst_32 = arith.constant 1.000000e+00 : f32
    %48 = vector.broadcast %cst_32 : f32 to vector<8x784xf32>
    %49 = arith.addf %48, %47 : vector<8x784xf32>
    %50 = arith.divf %48, %49 : vector<8x784xf32>
    %c0_33 = arith.constant 0 : index
    %c0_34 = arith.constant 0 : index
    %51 = vector.load %arg15[%c0_33, %c0_34] : memref<8x784xf32, #tpu.memory_space<vmem>>, vector<8x784xf32>
    tpu.vector_store %arg15[%c0_33, %c0_34], %50 {strides = array<i32>} : memref<8x784xf32, #tpu.memory_space<vmem>>, vector<8x784xf32>,
    %c0_35 = arith.constant 0 : index
    %c0_36 = arith.constant 0 : index
    %52 = vector.load %arg16[%c0_35, %c0_36] : memref<8x256xf32, #tpu.memory_space<vmem>>, vector<8x256xf32>
    tpu.vector_store %arg16[%c0_35, %c0_36], %19 {strides = array<i32>} : memref<8x256xf32, #tpu.memory_space<vmem>>, vector<8x256xf32>,
    return
  }
  func.func @transform_0(%arg0: i32) -> (i32, i32) {
    %c0_i32 = arith.constant 0 : i32
    %c0_i32_0 = arith.constant 0 : i32
    return %arg0, %c0_i32 : i32, i32
  }
  func.func @transform_1(%arg0: i32) -> (i32, i32) {
    %c0_i32 = arith.constant 0 : i32
    %c0_i32_0 = arith.constant 0 : i32
    return %arg0, %c0_i32 : i32, i32
  }
  func.func @transform_2(%arg0: i32) -> (i32, i32) {
    %c0_i32 = arith.constant 0 : i32
    %c0_i32_0 = arith.constant 0 : i32
    %c0_i32_1 = arith.constant 0 : i32
    return %c0_i32, %c0_i32_0 : i32, i32
  }
  func.func @transform_3(%arg0: i32) -> (i32, i32) {
    %c0_i32 = arith.constant 0 : i32
    %c0_i32_0 = arith.constant 0 : i32
    %c0_i32_1 = arith.constant 0 : i32
    return %c0_i32, %c0_i32_0 : i32, i32
  }
  func.func @transform_4(%arg0: i32) -> (i32, i32) {
    %c0_i32 = arith.constant 0 : i32
    %c0_i32_0 = arith.constant 0 : i32
    %c0_i32_1 = arith.constant 0 : i32
    return %c0_i32, %c0_i32_0 : i32, i32
  }
  func.func @transform_5(%arg0: i32) -> (i32, i32) {
    %c0_i32 = arith.constant 0 : i32
    %c0_i32_0 = arith.constant 0 : i32
    %c0_i32_1 = arith.constant 0 : i32
    return %c0_i32, %c0_i32_0 : i32, i32
  }
  func.func @transform_6(%arg0: i32) -> (i32, i32) {
    %c0_i32 = arith.constant 0 : i32
    %c0_i32_0 = arith.constant 0 : i32
    %c0_i32_1 = arith.constant 0 : i32
    return %c0_i32, %c0_i32_0 : i32, i32
  }
  func.func @transform_7(%arg0: i32) -> (i32, i32) {
    %c0_i32 = arith.constant 0 : i32
    %c0_i32_0 = arith.constant 0 : i32
    %c0_i32_1 = arith.constant 0 : i32
    return %c0_i32, %c0_i32_0 : i32, i32
  }
  func.func @transform_8(%arg0: i32) -> (i32, i32) {
    %c0_i32 = arith.constant 0 : i32
    %c0_i32_0 = arith.constant 0 : i32
    %c0_i32_1 = arith.constant 0 : i32
    return %c0_i32, %c0_i32_0 : i32, i32
  }
  func.func @transform_9(%arg0: i32) -> (i32, i32) {
    %c0_i32 = arith.constant 0 : i32
    %c0_i32_0 = arith.constant 0 : i32
    %c0_i32_1 = arith.constant 0 : i32
    return %c0_i32, %c0_i32_0 : i32, i32
  }
  func.func @transform_10(%arg0: i32) -> (i32, i32) {
    %c0_i32 = arith.constant 0 : i32
    %c0_i32_0 = arith.constant 0 : i32
    %c0_i32_1 = arith.constant 0 : i32
    return %c0_i32, %c0_i32_0 : i32, i32
  }
  func.func @transform_11(%arg0: i32) -> (i32, i32) {
    %c0_i32 = arith.constant 0 : i32
    %c0_i32_0 = arith.constant 0 : i32
    %c0_i32_1 = arith.constant 0 : i32
    return %c0_i32, %c0_i32_0 : i32, i32
  }
  func.func @transform_12(%arg0: i32) -> (i32, i32) {
    %c0_i32 = arith.constant 0 : i32
    %c0_i32_0 = arith.constant 0 : i32
    %c0_i32_1 = arith.constant 0 : i32
    return %c0_i32, %c0_i32_0 : i32, i32
  }
  func.func @transform_13(%arg0: i32) -> (i32, i32) {
    %c0_i32 = arith.constant 0 : i32
    %c0_i32_0 = arith.constant 0 : i32
    %c0_i32_1 = arith.constant 0 : i32
    return %c0_i32, %c0_i32_0 : i32, i32
  }
  func.func @transform_14(%arg0: i32) -> (i32, i32) {
    %c0_i32 = arith.constant 0 : i32
    %c0_i32_0 = arith.constant 0 : i32
    return %arg0, %c0_i32 : i32, i32
  }
  func.func @transform_15(%arg0: i32) -> (i32, i32) {
    %c0_i32 = arith.constant 0 : i32
    %c0_i32_0 = arith.constant 0 : i32
    return %arg0, %c0_i32 : i32, i32
  }
}

</mosaic_0001>

<llo_original>
// kernel: mnist1_forward.1
$region0: #{mnist1_forward.1}
  #allocation0 [shape = 'u32[]', space=smem, size = 0x4, offset = 0x4, fixed_abs, tag = 'smem constant byte address 0x4 - core index']
  #allocation1 [shape = 'u32[144,128]{1,0:T(1,128)}', space=vmem, size = 0x12000, scoped, tag = 'internal scratch']
  %s0 = inlined_call_operand.vmem [shape: bf16[8,784], index: 0, kind: input, shape index: {}]
  %s1 = inlined_call_operand.vmem [shape: f32[8,128], index: 1, kind: input, shape index: {}]
  %s2 = inlined_call_operand.vmem [shape: bf16[784,256], index: 2, kind: input, shape index: {}]
  %s3 = inlined_call_operand.vmem [shape: f32[1,256], index: 3, kind: input, shape index: {}]
  %s4 = inlined_call_operand.vmem [shape: bf16[256,256], index: 4, kind: input, shape index: {}]
  %s5 = inlined_call_operand.vmem [shape: f32[1,256], index: 5, kind: input, shape index: {}]
  %s6 = inlined_call_operand.vmem [shape: bf16[256,256], index: 6, kind: input, shape index: {}]
  %s7 = inlined_call_operand.vmem [shape: f32[1,256], index: 7, kind: input, shape index: {}]
  %s8 = inlined_call_operand.vmem [shape: bf16[128,256], index: 8, kind: input, shape index: {}]
  %s9 = inlined_call_operand.vmem [shape: f32[1,256], index: 9, kind: input, shape index: {}]
  %s10 = inlined_call_operand.vmem [shape: bf16[256,256], index: 10, kind: input, shape index: {}]
  %s11 = inlined_call_operand.vmem [shape: f32[1,256], index: 11, kind: input, shape index: {}]
  %s12 = inlined_call_operand.vmem [shape: bf16[256,784], index: 12, kind: input, shape index: {}]
  %s13 = inlined_call_operand.vmem [shape: f32[1,784], index: 13, kind: input, shape index: {}]
  %s14 = inlined_call_operand.hbm [shape: f32[8,784], index: 14, kind: output, shape index: {0}]
  %s15 = inlined_call_operand.vmem [shape: f32[8,256], index: 15, kind: output, shape index: {1}]
  %16 = xla_tuple %s14, %s15
  %s17 = sld [smem:[#allocation0]]
  $region74: #{mnist1_forward.1} parent=0
    _
  %s19 = ssub.s32 1, %s17
  %s20 = scalar_select 0, %s19, %s17
  $region1: #{mnist1_forward.1} parent=0
    #allocation2 [shape = 'u8[28672]{0}', space=vmem, size = 0x7000, scoped, tag = 'output window, operand 0, single buffered']
    #allocation3 [shape = 's32[1]{0}', space=sflag, size = 0x4, scoped, tag = 'scoped memory for mnist1_forward.1']
    %21 = vsyncpa [#allocation3], 0
    // Predicated region
    $region2: #{mnist1_forward.1} parent=1 // pred_check
      _
    $region3: #{mnist1_forward.1} parent=1 // pred_check_branch
      %23 = sbr.rel (0) target = $region5
    $region4: #{mnist1_forward.1} parent=1 // pred_region
      _
    $region5: #{mnist1_forward.1} parent=1 // pred_fallthru
      _
    // Predicated region
    $region6: #{mnist1_forward.1} parent=1 // pred_check
      _
    $region7: #{mnist1_forward.1} parent=1 // pred_check_branch
      %25 = sbr.rel (0) target = $region9
    $region8: #{mnist1_forward.1} parent=1 // pred_region
      _
    $region9: #{mnist1_forward.1} parent=1 // pred_fallthru
      _
    // Predicated region
    $region10: #{mnist1_forward.1} parent=1 // pred_check
      _
    $region11: #{mnist1_forward.1} parent=1 // pred_check_branch
      %27 = sbr.rel (0) target = $region13
    $region12: #{mnist1_forward.1} parent=1 // pred_region
      _
    $region13: #{mnist1_forward.1} parent=1 // pred_fallthru
      _
    // Predicated region
    $region14: #{mnist1_forward.1} parent=1 // pred_check
      _
    $region15: #{mnist1_forward.1} parent=1 // pred_check_branch
      %29 = sbr.rel (0) target = $region17
    $region16: #{mnist1_forward.1} parent=1 // pred_region
      _
    $region17: #{mnist1_forward.1} parent=1 // pred_fallthru
      _
    // Predicated region
    $region18: #{mnist1_forward.1} parent=1 // pred_check
      _
    $region19: #{mnist1_forward.1} parent=1 // pred_check_branch
      %31 = sbr.rel (0) target = $region21
    $region20: #{mnist1_forward.1} parent=1 // pred_region
      _
    $region21: #{mnist1_forward.1} parent=1 // pred_fallthru
      _
    // Predicated region
    $region22: #{mnist1_forward.1} parent=1 // pred_check
      _
    $region23: #{mnist1_forward.1} parent=1 // pred_check_branch
      %33 = sbr.rel (0) target = $region25
    $region24: #{mnist1_forward.1} parent=1 // pred_region
      _
    $region25: #{mnist1_forward.1} parent=1 // pred_fallthru
      _
    // Predicated region
    $region26: #{mnist1_forward.1} parent=1 // pred_check
      _
    $region27: #{mnist1_forward.1} parent=1 // pred_check_branch
      %35 = sbr.rel (0) target = $region29
    $region28: #{mnist1_forward.1} parent=1 // pred_region
      _
    $region29: #{mnist1_forward.1} parent=1 // pred_fallthru
      _
    // Predicated region
    $region30: #{mnist1_forward.1} parent=1 // pred_check
      _
    $region31: #{mnist1_forward.1} parent=1 // pred_check_branch
      %37 = sbr.rel (0) target = $region33
    $region32: #{mnist1_forward.1} parent=1 // pred_region
      _
    $region33: #{mnist1_forward.1} parent=1 // pred_fallthru
      _
    // Predicated region
    $region34: #{mnist1_forward.1} parent=1 // pred_check
      _
    $region35: #{mnist1_forward.1} parent=1 // pred_check_branch
      %39 = sbr.rel (0) target = $region37
    $region36: #{mnist1_forward.1} parent=1 // pred_region
      _
    $region37: #{mnist1_forward.1} parent=1 // pred_fallthru
      _
    // Predicated region
    $region38: #{mnist1_forward.1} parent=1 // pred_check
      _
    $region39: #{mnist1_forward.1} parent=1 // pred_check_branch
      %41 = sbr.rel (0) target = $region41
    $region40: #{mnist1_forward.1} parent=1 // pred_region
      _
    $region41: #{mnist1_forward.1} parent=1 // pred_fallthru
      _
    // Predicated region
    $region42: #{mnist1_forward.1} parent=1 // pred_check
      _
    $region43: #{mnist1_forward.1} parent=1 // pred_check_branch
      %43 = sbr.rel (0) target = $region45
    $region44: #{mnist1_forward.1} parent=1 // pred_region
      _
    $region45: #{mnist1_forward.1} parent=1 // pred_fallthru
      _
    // Predicated region
    $region46: #{mnist1_forward.1} parent=1 // pred_check
      _
    $region47: #{mnist1_forward.1} parent=1 // pred_check_branch
      %45 = sbr.rel (0) target = $region49
    $region48: #{mnist1_forward.1} parent=1 // pred_region
      _
    $region49: #{mnist1_forward.1} parent=1 // pred_fallthru
      _
    // Predicated region
    $region50: #{mnist1_forward.1} parent=1 // pred_check
      _
    $region51: #{mnist1_forward.1} parent=1 // pred_check_branch
      %47 = sbr.rel (0) target = $region53
    $region52: #{mnist1_forward.1} parent=1 // pred_region
      _
    $region53: #{mnist1_forward.1} parent=1 // pred_fallthru
      _
    // Predicated region
    $region54: #{mnist1_forward.1} parent=1 // pred_check
      _
    $region55: #{mnist1_forward.1} parent=1 // pred_check_branch
      %49 = sbr.rel (0) target = $region57
    $region56: #{mnist1_forward.1} parent=1 // pred_region
      _
    $region57: #{mnist1_forward.1} parent=1 // pred_fallthru
      _
    %v51 = vld [vmem:[%s0] sm:$0xff]
    %v52 = vld [vmem:[%s0 + $0x8] sm:$0xff]
    %v53 = vld [vmem:[%s0 + $0x10] sm:$0xff]
    %v54 = vld [vmem:[%s0 + $0x18] sm:$0xf]
    %v55 = vld [vmem:[%s2] sm:$0xff]
    %v56 = vld [vmem:[%s2 + $0x8] sm:$0xff]
    %v57 = vld [vmem:[%s2 + $0x10] sm:$0xff]
    %v58 = vld [vmem:[%s2 + $0x18] sm:$0xff]
    %v59 = vld [vmem:[%s2 + $0x20] sm:$0xff]
    %v60 = vld [vmem:[%s2 + $0x28] sm:$0xff]
    %v61 = vld [vmem:[%s2 + $0x30] sm:$0xff]
    %v62 = vld [vmem:[%s2 + $0x38] sm:$0xff]
    %v63 = vld [vmem:[%s2 + $0x40] sm:$0xff]
    %v64 = vld [vmem:[%s2 + $0x48] sm:$0xff]
    %v65 = vld [vmem:[%s2 + $0x50] sm:$0xff]
    %v66 = vld [vmem:[%s2 + $0x58] sm:$0xff]
    %v67 = vld [vmem:[%s2 + $0x60] sm:$0xff]
    %v68 = vld [vmem:[%s2 + $0x68] sm:$0xff]
    %v69 = vld [vmem:[%s2 + $0x70] sm:$0xff]
    %v70 = vld [vmem:[%s2 + $0x78] sm:$0xff]
    %v71 = vld [vmem:[%s2 + $0x80] sm:$0xff]
    %v72 = vld [vmem:[%s2 + $0x88] sm:$0xff]
    %v73 = vld [vmem:[%s2 + $0x90] sm:$0xff]
    %v74 = vld [vmem:[%s2 + $0x98] sm:$0xff]
    %v75 = vld [vmem:[%s2 + $0xa0] sm:$0xff]
    %v76 = vld [vmem:[%s2 + $0xa8] sm:$0xff]
    %v77 = vld [vmem:[%s2 + $0xb0] sm:$0xff]
    %v78 = vld [vmem:[%s2 + $0xb8] sm:$0xff]
    %v79 = vld [vmem:[%s2 + $0xc0] sm:$0xff]
    %v80 = vld [vmem:[%s2 + $0xc8] sm:$0xff]
    %v81 = vld [vmem:[%s2 + $0xd0] sm:$0xff]
    %v82 = vld [vmem:[%s2 + $0xd8] sm:$0xff]
    %v83 = vld [vmem:[%s2 + $0xe0] sm:$0xff]
    %v84 = vld [vmem:[%s2 + $0xe8] sm:$0xff]
    %v85 = vld [vmem:[%s2 + $0xf0] sm:$0xff]
    %v86 = vld [vmem:[%s2 + $0xf8] sm:$0xff]
    %v87 = vld [vmem:[%s2 + $0x100] sm:$0xff]
    %v88 = vld [vmem:[%s2 + $0x108] sm:$0xff]
    %v89 = vld [vmem:[%s2 + $0x110] sm:$0xff]
    %v90 = vld [vmem:[%s2 + $0x118] sm:$0xff]
    %v91 = vld [vmem:[%s2 + $0x120] sm:$0xff]
    %v92 = vld [vmem:[%s2 + $0x128] sm:$0xff]
    %v93 = vld [vmem:[%s2 + $0x130] sm:$0xff]
    %v94 = vld [vmem:[%s2 + $0x138] sm:$0xff]
    %v95 = vld [vmem:[%s2 + $0x140] sm:$0xff]
    %v96 = vld [vmem:[%s2 + $0x148] sm:$0xff]
    %v97 = vld [vmem:[%s2 + $0x150] sm:$0xff]
    %v98 = vld [vmem:[%s2 + $0x158] sm:$0xff]
    %v99 = vld [vmem:[%s2 + $0x160] sm:$0xff]
    %v100 = vld [vmem:[%s2 + $0x168] sm:$0xff]
    %v101 = vld [vmem:[%s2 + $0x170] sm:$0xff]
    %v102 = vld [vmem:[%s2 + $0x178] sm:$0xff]
    %v103 = vld [vmem:[%s2 + $0x180] sm:$0xff]
    %v104 = vld [vmem:[%s2 + $0x188] sm:$0xff]
    %v105 = vld [vmem:[%s2 + $0x190] sm:$0xff]
    %v106 = vld [vmem:[%s2 + $0x198] sm:$0xff]
    %v107 = vld [vmem:[%s2 + $0x1a0] sm:$0xff]
    %v108 = vld [vmem:[%s2 + $0x1a8] sm:$0xff]
    %v109 = vld [vmem:[%s2 + $0x1b0] sm:$0xff]
    %v110 = vld [vmem:[%s2 + $0x1b8] sm:$0xff]
    %v111 = vld [vmem:[%s2 + $0x1c0] sm:$0xff]
    %v112 = vld [vmem:[%s2 + $0x1c8] sm:$0xff]
    %v113 = vld [vmem:[%s2 + $0x1d0] sm:$0xff]
    %v114 = vld [vmem:[%s2 + $0x1d8] sm:$0xff]
    %v115 = vld [vmem:[%s2 + $0x1e0] sm:$0xff]
    %v116 = vld [vmem:[%s2 + $0x1e8] sm:$0xff]
    %v117 = vld [vmem:[%s2 + $0x1f0] sm:$0xff]
    %v118 = vld [vmem:[%s2 + $0x1f8] sm:$0xff]
    %v119 = vld [vmem:[%s2 + $0x200] sm:$0xff]
    %v120 = vld [vmem:[%s2 + $0x208] sm:$0xff]
    %v121 = vld [vmem:[%s2 + $0x210] sm:$0xff]
    %v122 = vld [vmem:[%s2 + $0x218] sm:$0xff]
    %v123 = vld [vmem:[%s2 + $0x220] sm:$0xff]
    %v124 = vld [vmem:[%s2 + $0x228] sm:$0xff]
    %v125 = vld [vmem:[%s2 + $0x230] sm:$0xff]
    %v126 = vld [vmem:[%s2 + $0x238] sm:$0xff]
    %v127 = vld [vmem:[%s2 + $0x240] sm:$0xff]
    %v128 = vld [vmem:[%s2 + $0x248] sm:$0xff]
    %v129 = vld [vmem:[%s2 + $0x250] sm:$0xff]
    %v130 = vld [vmem:[%s2 + $0x258] sm:$0xff]
    %v131 = vld [vmem:[%s2 + $0x260] sm:$0xff]
    %v132 = vld [vmem:[%s2 + $0x268] sm:$0xff]
    %v133 = vld [vmem:[%s2 + $0x270] sm:$0xff]
    %v134 = vld [vmem:[%s2 + $0x278] sm:$0xff]
    %v135 = vld [vmem:[%s2 + $0x280] sm:$0xff]
    %v136 = vld [vmem:[%s2 + $0x288] sm:$0xff]
    %v137 = vld [vmem:[%s2 + $0x290] sm:$0xff]
    %v138 = vld [vmem:[%s2 + $0x298] sm:$0xff]
    %v139 = vld [vmem:[%s2 + $0x2a0] sm:$0xff]
    %v140 = vld [vmem:[%s2 + $0x2a8] sm:$0xff]
    %v141 = vld [vmem:[%s2 + $0x2b0] sm:$0xff]
    %v142 = vld [vmem:[%s2 + $0x2b8] sm:$0xff]
    %v143 = vld [vmem:[%s2 + $0x2c0] sm:$0xff]
    %v144 = vld [vmem:[%s2 + $0x2c8] sm:$0xff]
    %v145 = vld [vmem:[%s2 + $0x2d0] sm:$0xff]
    %v146 = vld [vmem:[%s2 + $0x2d8] sm:$0xff]
    %v147 = vld [vmem:[%s2 + $0x2e0] sm:$0xff]
    %v148 = vld [vmem:[%s2 + $0x2e8] sm:$0xff]
    %v149 = vld [vmem:[%s2 + $0x2f0] sm:$0xff]
    %v150 = vld [vmem:[%s2 + $0x2f8] sm:$0xff]
    %v151 = vld [vmem:[%s2 + $0x300] sm:$0xff]
    %v152 = vld [vmem:[%s2 + $0x308] sm:$0xff]
    %v153 = vld [vmem:[%s3] sm:$0x3]
    %v155 = vlaneseq
    %v156 = vshrl.u32 %v155, 7
    %v157 = vsub.s32 0, %v156
    %v158 = vrot.slane %v153, %v157
    %v159 = vlaneseq
    %v160 = vshrl.u32 %v159, 7
    %v161 = vsub.s32 1, %v160
    %v162 = vrot.slane %v153, %v161
    %v169 = vunpack.c.l.b16 %v51
    %v170 = vunpack.c.h.b16 %v51
    %v171 = vunpack.c.l.b16 %v52
    %v172 = vunpack.c.h.b16 %v52
    %v173 = vunpack.c.l.b16 %v53
    %v174 = vunpack.c.h.b16 %v53
    %v175 = vunpack.c.l.b16 %v54
    %v176 = vpack.c.b16 %v169, %v169
    %v177 = vpack.c.b16 %v170, %v170
    %v178 = vpack.c.b16 %v171, %v171
    %v179 = vpack.c.b16 %v172, %v172
    %v180 = vpack.c.b16 %v173, %v173
    %v181 = vpack.c.b16 %v174, %v174
    %v182 = vpack.c.b16 %v175, %v175
    %v287 = vunpack.c.l.b16 %v55
    %v288 = vunpack.c.h.b16 %v55
    %v289 = vunpack.c.l.b16 %v56
    %v290 = vunpack.c.h.b16 %v56
    %v291 = vunpack.c.l.b16 %v57
    %v292 = vunpack.c.h.b16 %v57
    %v293 = vunpack.c.l.b16 %v58
    %v294 = vunpack.c.h.b16 %v58
    %v295 = vunpack.c.l.b16 %v59
    %v296 = vunpack.c.h.b16 %v59
    %v297 = vunpack.c.l.b16 %v60
    %v298 = vunpack.c.h.b16 %v60
    %v299 = vunpack.c.l.b16 %v61
    %v300 = vunpack.c.h.b16 %v61
    %v301 = vunpack.c.l.b16 %v62
    %v302 = vunpack.c.h.b16 %v62
    %v303 = vunpack.c.l.b16 %v63
    %v304 = vunpack.c.h.b16 %v63
    %v305 = vunpack.c.l.b16 %v64
    %v306 = vunpack.c.h.b16 %v64
    %v307 = vunpack.c.l.b16 %v65
    %v308 = vunpack.c.h.b16 %v65
    %v309 = vunpack.c.l.b16 %v66
    %v310 = vunpack.c.h.b16 %v66
    %v311 = vunpack.c.l.b16 %v67
    %v312 = vunpack.c.h.b16 %v67
    %v313 = vunpack.c.l.b16 %v68
    %v314 = vunpack.c.h.b16 %v68
    %v315 = vunpack.c.l.b16 %v69
    %v316 = vunpack.c.h.b16 %v69
    %v317 = vunpack.c.l.b16 %v70
    %v318 = vunpack.c.h.b16 %v70
    %v319 = vunpack.c.l.b16 %v71
    %v320 = vunpack.c.h.b16 %v71
    %v321 = vunpack.c.l.b16 %v72
    %v322 = vunpack.c.h.b16 %v72
    %v323 = vunpack.c.l.b16 %v73
    %v324 = vunpack.c.h.b16 %v73
    %v325 = vunpack.c.l.b16 %v74
    %v326 = vunpack.c.h.b16 %v74
    %v327 = vunpack.c.l.b16 %v75
    %v328 = vunpack.c.h.b16 %v75
    %v329 = vunpack.c.l.b16 %v76
    %v330 = vunpack.c.h.b16 %v76
    %v331 = vunpack.c.l.b16 %v77
    %v332 = vunpack.c.h.b16 %v77
    %v333 = vunpack.c.l.b16 %v78
    %v334 = vunpack.c.h.b16 %v78
    %v335 = vunpack.c.l.b16 %v79
    %v336 = vunpack.c.h.b16 %v79
    %v337 = vunpack.c.l.b16 %v80
    %v338 = vunpack.c.h.b16 %v80
    %v339 = vunpack.c.l.b16 %v81
    %v340 = vunpack.c.h.b16 %v81
    %v341 = vunpack.c.l.b16 %v82
    %v342 = vunpack.c.h.b16 %v82
    %v343 = vunpack.c.l.b16 %v83
    %v344 = vunpack.c.h.b16 %v83
    %v345 = vunpack.c.l.b16 %v84
    %v346 = vunpack.c.h.b16 %v84
    %v347 = vunpack.c.l.b16 %v85
    %v348 = vunpack.c.h.b16 %v85
    %v349 = vunpack.c.l.b16 %v86
    %v350 = vunpack.c.h.b16 %v86
    %v351 = vunpack.c.l.b16 %v87
    %v352 = vunpack.c.h.b16 %v87
    %v353 = vunpack.c.l.b16 %v88
    %v354 = vunpack.c.h.b16 %v88
    %v355 = vunpack.c.l.b16 %v89
    %v356 = vunpack.c.h.b16 %v89
    %v357 = vunpack.c.l.b16 %v90
    %v358 = vunpack.c.h.b16 %v90
    %v359 = vunpack.c.l.b16 %v91
    %v360 = vunpack.c.h.b16 %v91
    %v361 = vunpack.c.l.b16 %v92
    %v362 = vunpack.c.h.b16 %v92
    %v363 = vunpack.c.l.b16 %v93
    %v364 = vunpack.c.h.b16 %v93
    %v365 = vunpack.c.l.b16 %v94
    %v366 = vunpack.c.h.b16 %v94
    %v367 = vunpack.c.l.b16 %v95
    %v368 = vunpack.c.h.b16 %v95
    %v369 = vunpack.c.l.b16 %v96
    %v370 = vunpack.c.h.b16 %v96
    %v371 = vunpack.c.l.b16 %v97
    %v372 = vunpack.c.h.b16 %v97
    %v373 = vunpack.c.l.b16 %v98
    %v374 = vunpack.c.h.b16 %v98
    %v375 = vunpack.c.l.b16 %v99
    %v376 = vunpack.c.h.b16 %v99
    %v377 = vunpack.c.l.b16 %v100
    %v378 = vunpack.c.h.b16 %v100
    %v379 = vunpack.c.l.b16 %v101
    %v380 = vunpack.c.h.b16 %v101
    %v381 = vunpack.c.l.b16 %v102
    %v382 = vunpack.c.h.b16 %v102
    %v383 = vunpack.c.l.b16 %v103
    %v384 = vunpack.c.h.b16 %v103
    %v385 = vunpack.c.l.b16 %v104
    %v386 = vunpack.c.h.b16 %v104
    %v387 = vunpack.c.l.b16 %v105
    %v388 = vunpack.c.h.b16 %v105
    %v389 = vunpack.c.l.b16 %v106
    %v390 = vunpack.c.h.b16 %v106
    %v391 = vunpack.c.l.b16 %v107
    %v392 = vunpack.c.h.b16 %v107
    %v393 = vunpack.c.l.b16 %v108
    %v394 = vunpack.c.h.b16 %v108
    %v395 = vunpack.c.l.b16 %v109
    %v396 = vunpack.c.h.b16 %v109
    %v397 = vunpack.c.l.b16 %v110
    %v398 = vunpack.c.h.b16 %v110
    %v399 = vunpack.c.l.b16 %v111
    %v400 = vunpack.c.h.b16 %v111
    %v401 = vunpack.c.l.b16 %v112
    %v402 = vunpack.c.h.b16 %v112
    %v403 = vunpack.c.l.b16 %v113
    %v404 = vunpack.c.h.b16 %v113
    %v405 = vunpack.c.l.b16 %v114
    %v406 = vunpack.c.h.b16 %v114
    %v407 = vunpack.c.l.b16 %v115
    %v408 = vunpack.c.h.b16 %v115
    %v409 = vunpack.c.l.b16 %v116
    %v410 = vunpack.c.h.b16 %v116
    %v411 = vunpack.c.l.b16 %v117
    %v412 = vunpack.c.h.b16 %v117
    %v413 = vunpack.c.l.b16 %v118
    %v414 = vunpack.c.h.b16 %v118
    %v415 = vunpack.c.l.b16 %v119
    %v416 = vunpack.c.h.b16 %v119
    %v417 = vunpack.c.l.b16 %v120
    %v418 = vunpack.c.h.b16 %v120
    %v419 = vunpack.c.l.b16 %v121
    %v420 = vunpack.c.h.b16 %v121
    %v421 = vunpack.c.l.b16 %v122
    %v422 = vunpack.c.h.b16 %v122
    %v423 = vunpack.c.l.b16 %v123
    %v424 = vunpack.c.h.b16 %v123
    %v425 = vunpack.c.l.b16 %v124
    %v426 = vunpack.c.h.b16 %v124
    %v427 = vunpack.c.l.b16 %v125
    %v428 = vunpack.c.h.b16 %v125
    %v429 = vunpack.c.l.b16 %v126
    %v430 = vunpack.c.h.b16 %v126
    %v431 = vunpack.c.l.b16 %v127
    %v432 = vunpack.c.h.b16 %v127
    %v433 = vunpack.c.l.b16 %v128
    %v434 = vunpack.c.h.b16 %v128
    %v435 = vunpack.c.l.b16 %v129
    %v436 = vunpack.c.h.b16 %v129
    %v437 = vunpack.c.l.b16 %v130
    %v438 = vunpack.c.h.b16 %v130
    %v439 = vunpack.c.l.b16 %v131
    %v440 = vunpack.c.h.b16 %v131
    %v441 = vunpack.c.l.b16 %v132
    %v442 = vunpack.c.h.b16 %v132
    %v443 = vunpack.c.l.b16 %v133
    %v444 = vunpack.c.h.b16 %v133
    %v445 = vunpack.c.l.b16 %v134
    %v446 = vunpack.c.h.b16 %v134
    %v447 = vunpack.c.l.b16 %v135
    %v448 = vunpack.c.h.b16 %v135
    %v449 = vunpack.c.l.b16 %v136
    %v450 = vunpack.c.h.b16 %v136
    %v451 = vunpack.c.l.b16 %v137
    %v452 = vunpack.c.h.b16 %v137
    %v453 = vunpack.c.l.b16 %v138
    %v454 = vunpack.c.h.b16 %v138
    %v455 = vunpack.c.l.b16 %v139
    %v456 = vunpack.c.h.b16 %v139
    %v457 = vunpack.c.l.b16 %v140
    %v458 = vunpack.c.h.b16 %v140
    %v459 = vunpack.c.l.b16 %v141
    %v460 = vunpack.c.h.b16 %v141
    %v461 = vunpack.c.l.b16 %v142
    %v462 = vunpack.c.h.b16 %v142
    %v463 = vunpack.c.l.b16 %v143
    %v464 = vunpack.c.h.b16 %v143
    %v465 = vunpack.c.l.b16 %v144
    %v466 = vunpack.c.h.b16 %v144
    %v467 = vunpack.c.l.b16 %v145
    %v468 = vunpack.c.h.b16 %v145
    %v469 = vunpack.c.l.b16 %v146
    %v470 = vunpack.c.h.b16 %v146
    %v471 = vunpack.c.l.b16 %v147
    %v472 = vunpack.c.h.b16 %v147
    %v473 = vunpack.c.l.b16 %v148
    %v474 = vunpack.c.h.b16 %v148
    %v475 = vunpack.c.l.b16 %v149
    %v476 = vunpack.c.h.b16 %v149
    %v477 = vunpack.c.l.b16 %v150
    %v478 = vunpack.c.h.b16 %v150
    %v479 = vunpack.c.l.b16 %v151
    %v480 = vunpack.c.h.b16 %v151
    %v481 = vunpack.c.l.b16 %v152
    %v482 = vunpack.c.h.b16 %v152
    %v483 = vpack.c.b16 %v289, %v287
    %v484 = vpack.c.b16 %v290, %v288
    %v485 = vpack.c.b16 %v293, %v291
    %v486 = vpack.c.b16 %v294, %v292
    %v487 = vpack.c.b16 %v297, %v295
    %v488 = vpack.c.b16 %v298, %v296
    %v489 = vpack.c.b16 %v301, %v299
    %v490 = vpack.c.b16 %v302, %v300
    %v491 = vpack.c.b16 %v305, %v303
    %v492 = vpack.c.b16 %v306, %v304
    %v493 = vpack.c.b16 %v309, %v307
    %v494 = vpack.c.b16 %v310, %v308
    %v495 = vpack.c.b16 %v313, %v311
    %v496 = vpack.c.b16 %v314, %v312
    %v497 = vpack.c.b16 %v317, %v315
    %v498 = vpack.c.b16 %v318, %v316
    %v499 = vpack.c.b16 %v321, %v319
    %v500 = vpack.c.b16 %v322, %v320
    %v501 = vpack.c.b16 %v325, %v323
    %v502 = vpack.c.b16 %v326, %v324
    %v503 = vpack.c.b16 %v329, %v327
    %v504 = vpack.c.b16 %v330, %v328
    %v505 = vpack.c.b16 %v333, %v331
    %v506 = vpack.c.b16 %v334, %v332
    %v507 = vpack.c.b16 %v337, %v335
    %v508 = vpack.c.b16 %v338, %v336
    %v509 = vpack.c.b16 %v341, %v339
    %v510 = vpack.c.b16 %v342, %v340
    %v511 = vpack.c.b16 %v345, %v343
    %v512 = vpack.c.b16 %v346, %v344
    %v513 = vpack.c.b16 %v349, %v347
    %v514 = vpack.c.b16 %v350, %v348
    %v515 = vpack.c.b16 %v353, %v351
    %v516 = vpack.c.b16 %v354, %v352
    %v517 = vpack.c.b16 %v357, %v355
    %v518 = vpack.c.b16 %v358, %v356
    %v519 = vpack.c.b16 %v361, %v359
    %v520 = vpack.c.b16 %v362, %v360
    %v521 = vpack.c.b16 %v365, %v363
    %v522 = vpack.c.b16 %v366, %v364
    %v523 = vpack.c.b16 %v369, %v367
    %v524 = vpack.c.b16 %v370, %v368
    %v525 = vpack.c.b16 %v373, %v371
    %v526 = vpack.c.b16 %v374, %v372
    %v527 = vpack.c.b16 %v377, %v375
    %v528 = vpack.c.b16 %v378, %v376
    %v529 = vpack.c.b16 %v381, %v379
    %v530 = vpack.c.b16 %v382, %v380
    %v531 = vpack.c.b16 %v385, %v383
    %v532 = vpack.c.b16 %v386, %v384
    %v533 = vpack.c.b16 %v389, %v387
    %v534 = vpack.c.b16 %v390, %v388
    %v535 = vpack.c.b16 %v393, %v391
    %v536 = vpack.c.b16 %v394, %v392
    %v537 = vpack.c.b16 %v397, %v395
    %v538 = vpack.c.b16 %v398, %v396
    %v539 = vpack.c.b16 %v401, %v399
    %v540 = vpack.c.b16 %v402, %v400
    %v541 = vpack.c.b16 %v405, %v403
    %v542 = vpack.c.b16 %v406, %v404
    %v543 = vpack.c.b16 %v409, %v407
    %v544 = vpack.c.b16 %v410, %v408
    %v545 = vpack.c.b16 %v413, %v411
    %v546 = vpack.c.b16 %v414, %v412
    %v547 = vpack.c.b16 %v417, %v415
    %v548 = vpack.c.b16 %v418, %v416
    %v549 = vpack.c.b16 %v421, %v419
    %v550 = vpack.c.b16 %v422, %v420
    %v551 = vpack.c.b16 %v425, %v423
    %v552 = vpack.c.b16 %v426, %v424
    %v553 = vpack.c.b16 %v429, %v427
    %v554 = vpack.c.b16 %v430, %v428
    %v555 = vpack.c.b16 %v433, %v431
    %v556 = vpack.c.b16 %v434, %v432
    %v557 = vpack.c.b16 %v437, %v435
    %v558 = vpack.c.b16 %v438, %v436
    %v559 = vpack.c.b16 %v441, %v439
    %v560 = vpack.c.b16 %v442, %v440
    %v561 = vpack.c.b16 %v445, %v443
    %v562 = vpack.c.b16 %v446, %v444
    %v563 = vpack.c.b16 %v449, %v447
    %v564 = vpack.c.b16 %v450, %v448
    %v565 = vpack.c.b16 %v453, %v451
    %v566 = vpack.c.b16 %v454, %v452
    %v567 = vpack.c.b16 %v457, %v455
    %v568 = vpack.c.b16 %v458, %v456
    %v569 = vpack.c.b16 %v461, %v459
    %v570 = vpack.c.b16 %v462, %v460
    %v571 = vpack.c.b16 %v465, %v463
    %v572 = vpack.c.b16 %v466, %v464
    %v573 = vpack.c.b16 %v469, %v467
    %v574 = vpack.c.b16 %v470, %v468
    %v575 = vpack.c.b16 %v473, %v471
    %v576 = vpack.c.b16 %v474, %v472
    %v577 = vpack.c.b16 %v477, %v475
    %v578 = vpack.c.b16 %v478, %v476
    %v579 = vpack.c.b16 %v481, %v479
    %v580 = vpack.c.b16 %v482, %v480
    %vm679 = vcmask 130048
    %v681 = vsel %vm679, %v182, 0
    %683 = vmatprep.subr.bf16.mxu0 %v484
    %684 = vmatpush1.bf16.msra.mxu0 %v483
    %685 = vmatprep.subr.bf16.mxu0 %v486
    %686 = vmatpush1.bf16.msra.mxu0 %v485
    %687 = vmatprep.subr.bf16.mxu0 %v488
    %688 = vmatpush1.bf16.msra.mxu0 %v487
    %689 = vmatprep.subr.bf16.mxu0 %v490
    %690 = vmatpush1.bf16.msra.mxu0 %v489
    %691 = vmatprep.subr.bf16.mxu0 %v492
    %692 = vmatpush1.bf16.msra.mxu0 %v491
    %693 = vmatprep.subr.bf16.mxu0 %v494
    %694 = vmatpush1.bf16.msra.mxu0 %v493
    %695 = vmatprep.subr.bf16.mxu0 %v496
    %696 = vmatpush1.bf16.msra.mxu0 %v495
    %697 = vmatprep.subr.bf16.mxu0 %v498
    %698 = vmatpush1.bf16.msra.mxu0 %v497
    %699 = vmatprep.subr.bf16.mxu0 %v500
    %700 = vmatpush1.bf16.msra.mxu0 %v499
    %701 = vmatprep.subr.bf16.mxu0 %v502
    %702 = vmatpush1.bf16.msra.mxu0 %v501
    %703 = vmatprep.subr.bf16.mxu0 %v504
    %704 = vmatpush1.bf16.msra.mxu0 %v503
    %705 = vmatprep.subr.bf16.mxu0 %v506
    %706 = vmatpush1.bf16.msra.mxu0 %v505
    %707 = vmatprep.subr.bf16.mxu0 %v508
    %708 = vmatpush1.bf16.msra.mxu0 %v507
    %709 = vmatprep.subr.bf16.mxu0 %v510
    %710 = vmatpush1.bf16.msra.mxu0 %v509
    %711 = vmatprep.subr.bf16.mxu0 %v512
    %712 = vmatpush1.bf16.msra.mxu0 %v511
    %713 = vmatprep.subr.bf16.mxu0 %v514
    %714 = vmatpush1.bf16.msra.mxu0 %v513
    %715 = vmatprep.mubr.bf16.mxu0 %v177
    %716 = vmatmul.mubr.bf16.gmra.mrb[0].mxu0 %v176
    %v717 = vpop.f32.mrb[0].mxu0
    %v718 = vadd.f32 %v158, %v717
    %v719 = vpop.f32.mrb[0].mxu0
    %v720 = vadd.f32 %v162, %v719
    %v721 = vpop.f32.mrb[0].mxu0
    %v722 = vpop.f32.mrb[0].mxu0
    %723 = vdwg.mxu0
    %724 = vmatprep.subr.bf16.mxu0 %v516
    %725 = vmatpush1.bf16.msra.mxu0 %v515
    %726 = vmatprep.subr.bf16.mxu0 %v518
    %727 = vmatpush1.bf16.msra.mxu0 %v517
    %728 = vmatprep.subr.bf16.mxu0 %v520
    %729 = vmatpush1.bf16.msra.mxu0 %v519
    %730 = vmatprep.subr.bf16.mxu0 %v522
    %731 = vmatpush1.bf16.msra.mxu0 %v521
    %732 = vmatprep.subr.bf16.mxu0 %v524
    %733 = vmatpush1.bf16.msra.mxu0 %v523
    %734 = vmatprep.subr.bf16.mxu0 %v526
    %735 = vmatpush1.bf16.msra.mxu0 %v525
    %736 = vmatprep.subr.bf16.mxu0 %v528
    %737 = vmatpush1.bf16.msra.mxu0 %v527
    %738 = vmatprep.subr.bf16.mxu0 %v530
    %739 = vmatpush1.bf16.msra.mxu0 %v529
    %740 = vmatprep.subr.bf16.mxu0 %v532
    %741 = vmatpush1.bf16.msra.mxu0 %v531
    %742 = vmatprep.subr.bf16.mxu0 %v534
    %743 = vmatpush1.bf16.msra.mxu0 %v533
    %744 = vmatprep.subr.bf16.mxu0 %v536
    %745 = vmatpush1.bf16.msra.mxu0 %v535
    %746 = vmatprep.subr.bf16.mxu0 %v538
    %747 = vmatpush1.bf16.msra.mxu0 %v537
    %748 = vmatprep.subr.bf16.mxu0 %v540
    %749 = vmatpush1.bf16.msra.mxu0 %v539
    %750 = vmatprep.subr.bf16.mxu0 %v542
    %751 = vmatpush1.bf16.msra.mxu0 %v541
    %752 = vmatprep.subr.bf16.mxu0 %v544
    %753 = vmatpush1.bf16.msra.mxu0 %v543
    %754 = vmatprep.subr.bf16.mxu0 %v546
    %755 = vmatpush1.bf16.msra.mxu0 %v545
    %756 = vmatprep.mubr.bf16.mxu0 %v179
    %757 = vmatmul.mubr.bf16.gmra.mrb[0].mxu0 %v178
    %v758 = vpop.f32.mrb[0].mxu0
    %v759 = vadd.f32 %v718, %v758
    %v760 = vpop.f32.mrb[0].mxu0
    %v761 = vadd.f32 %v720, %v760
    %v762 = vpop.f32.mrb[0].mxu0
    %v763 = vpop.f32.mrb[0].mxu0
    %764 = vdwg.mxu0
    %765 = vmatprep.subr.bf16.mxu0 %v548
    %766 = vmatpush1.bf16.msra.mxu0 %v547
    %767 = vmatprep.subr.bf16.mxu0 %v550
    %768 = vmatpush1.bf16.msra.mxu0 %v549
    %769 = vmatprep.subr.bf16.mxu0 %v552
    %770 = vmatpush1.bf16.msra.mxu0 %v551
    %771 = vmatprep.subr.bf16.mxu0 %v554
    %772 = vmatpush1.bf16.msra.mxu0 %v553
    %773 = vmatprep.subr.bf16.mxu0 %v556
    %774 = vmatpush1.bf16.msra.mxu0 %v555
    %775 = vmatprep.subr.bf16.mxu0 %v558
    %776 = vmatpush1.bf16.msra.mxu0 %v557
    %777 = vmatprep.subr.bf16.mxu0 %v560
    %778 = vmatpush1.bf16.msra.mxu0 %v559
    %779 = vmatprep.subr.bf16.mxu0 %v562
    %780 = vmatpush1.bf16.msra.mxu0 %v561
    %781 = vmatprep.subr.bf16.mxu0 %v564
    %782 = vmatpush1.bf16.msra.mxu0 %v563
    %783 = vmatprep.subr.bf16.mxu0 %v566
    %784 = vmatpush1.bf16.msra.mxu0 %v565
    %785 = vmatprep.subr.bf16.mxu0 %v568
    %786 = vmatpush1.bf16.msra.mxu0 %v567
    %787 = vmatprep.subr.bf16.mxu0 %v570
    %788 = vmatpush1.bf16.msra.mxu0 %v569
    %789 = vmatprep.subr.bf16.mxu0 %v572
    %790 = vmatpush1.bf16.msra.mxu0 %v571
    %791 = vmatprep.subr.bf16.mxu0 %v574
    %792 = vmatpush1.bf16.msra.mxu0 %v573
    %793 = vmatprep.subr.bf16.mxu0 %v576
    %794 = vmatpush1.bf16.msra.mxu0 %v575
    %795 = vmatprep.subr.bf16.mxu0 %v578
    %796 = vmatpush1.bf16.msra.mxu0 %v577
    %797 = vmatprep.mubr.bf16.mxu0 %v181
    %798 = vmatmul.mubr.bf16.gmra.mrb[0].mxu0 %v180
    %v799 = vpop.f32.mrb[0].mxu0
    %v800 = vadd.f32 %v759, %v799
    %v801 = vpop.f32.mrb[0].mxu0
    %v802 = vadd.f32 %v761, %v801
    %v803 = vpop.f32.mrb[0].mxu0
    %v804 = vpop.f32.mrb[0].mxu0
    %805 = vdwg.mxu0
    %806 = vmatprep.subr.bf16.mxu0 %v580
    %807 = vmatpush1.bf16.msra.mxu0 %v579
    %808 = vmatprep.subr.bf16.mxu0 0
    %809 = vmatpush1.bf16.msra.mxu0 0
    %810 = vmatprep.subr.bf16.mxu0 0
    %811 = vmatpush1.bf16.msra.mxu0 0
    %812 = vmatprep.subr.bf16.mxu0 0
    %813 = vmatpush1.bf16.msra.mxu0 0
    %814 = vmatprep.subr.bf16.mxu0 0
    %815 = vmatpush1.bf16.msra.mxu0 0
    %816 = vmatprep.subr.bf16.mxu0 0
    %817 = vmatpush1.bf16.msra.mxu0 0
    %818 = vmatprep.subr.bf16.mxu0 0
    %819 = vmatpush1.bf16.msra.mxu0 0
    %820 = vmatprep.subr.bf16.mxu0 0
    %821 = vmatpush1.bf16.msra.mxu0 0
    %822 = vmatprep.subr.bf16.mxu0 0
    %823 = vmatpush1.bf16.msra.mxu0 0
    %824 = vmatprep.subr.bf16.mxu0 0
    %825 = vmatpush1.bf16.msra.mxu0 0
    %826 = vmatprep.subr.bf16.mxu0 0
    %827 = vmatpush1.bf16.msra.mxu0 0
    %828 = vmatprep.subr.bf16.mxu0 0
    %829 = vmatpush1.bf16.msra.mxu0 0
    %830 = vmatprep.subr.bf16.mxu0 0
    %831 = vmatpush1.bf16.msra.mxu0 0
    %832 = vmatprep.subr.bf16.mxu0 0
    %833 = vmatpush1.bf16.msra.mxu0 0
    %834 = vmatprep.subr.bf16.mxu0 0
    %835 = vmatpush1.bf16.msra.mxu0 0
    %836 = vmatprep.subr.bf16.mxu0 0
    %837 = vmatpush1.bf16.msra.mxu0 0
    %838 = vmatprep.mubr.bf16.mxu0 0
    %839 = vmatmul.mubr.bf16.gmra.mrb[0].mxu0 %v681
    %v840 = vpop.f32.mrb[0].mxu0
    %v841 = vadd.f32 %v800, %v840
    %v842 = vpop.f32.mrb[0].mxu0
    %v843 = vadd.f32 %v802, %v842
    %v844 = vpop.f32.mrb[0].mxu0
    %v845 = vpop.f32.mrb[0].mxu0
    %846 = vdwg.mxu0
    %v847 = vtanh.pop %v841
    %v848 = vtanh.pop %v843
    %v849 = vpack.c.bf16 %v847, %v847
    %v850 = vpack.c.bf16 %v848, %v848
    %v851 = vld [vmem:[%s4] sm:$0xff]
    %v852 = vld [vmem:[%s4 + $0x8] sm:$0xff]
    %v853 = vld [vmem:[%s4 + $0x10] sm:$0xff]
    %v854 = vld [vmem:[%s4 + $0x18] sm:$0xff]
    %v855 = vld [vmem:[%s4 + $0x20] sm:$0xff]
    %v856 = vld [vmem:[%s4 + $0x28] sm:$0xff]
    %v857 = vld [vmem:[%s4 + $0x30] sm:$0xff]
    %v858 = vld [vmem:[%s4 + $0x38] sm:$0xff]
    %v859 = vld [vmem:[%s4 + $0x40] sm:$0xff]
    %v860 = vld [vmem:[%s4 + $0x48] sm:$0xff]
    %v861 = vld [vmem:[%s4 + $0x50] sm:$0xff]
    %v862 = vld [vmem:[%s4 + $0x58] sm:$0xff]
    %v863 = vld [vmem:[%s4 + $0x60] sm:$0xff]
    %v864 = vld [vmem:[%s4 + $0x68] sm:$0xff]
    %v865 = vld [vmem:[%s4 + $0x70] sm:$0xff]
    %v866 = vld [vmem:[%s4 + $0x78] sm:$0xff]
    %v867 = vld [vmem:[%s4 + $0x80] sm:$0xff]
    %v868 = vld [vmem:[%s4 + $0x88] sm:$0xff]
    %v869 = vld [vmem:[%s4 + $0x90] sm:$0xff]
    %v870 = vld [vmem:[%s4 + $0x98] sm:$0xff]
    %v871 = vld [vmem:[%s4 + $0xa0] sm:$0xff]
    %v872 = vld [vmem:[%s4 + $0xa8] sm:$0xff]
    %v873 = vld [vmem:[%s4 + $0xb0] sm:$0xff]
    %v874 = vld [vmem:[%s4 + $0xb8] sm:$0xff]
    %v875 = vld [vmem:[%s4 + $0xc0] sm:$0xff]
    %v876 = vld [vmem:[%s4 + $0xc8] sm:$0xff]
    %v877 = vld [vmem:[%s4 + $0xd0] sm:$0xff]
    %v878 = vld [vmem:[%s4 + $0xd8] sm:$0xff]
    %v879 = vld [vmem:[%s4 + $0xe0] sm:$0xff]
    %v880 = vld [vmem:[%s4 + $0xe8] sm:$0xff]
    %v881 = vld [vmem:[%s4 + $0xf0] sm:$0xff]
    %v882 = vld [vmem:[%s4 + $0xf8] sm:$0xff]
    %v883 = vld [vmem:[%s5] sm:$0x3]
    %v885 = vlaneseq
    %v886 = vshrl.u32 %v885, 7
    %v887 = vsub.s32 0, %v886
    %v888 = vrot.slane %v883, %v887
    %v889 = vlaneseq
    %v890 = vshrl.u32 %v889, 7
    %v891 = vsub.s32 1, %v890
    %v892 = vrot.slane %v883, %v891
    %v927 = vunpack.c.l.b16 %v851
    %v928 = vunpack.c.h.b16 %v851
    %v929 = vunpack.c.l.b16 %v852
    %v930 = vunpack.c.h.b16 %v852
    %v931 = vunpack.c.l.b16 %v853
    %v932 = vunpack.c.h.b16 %v853
    %v933 = vunpack.c.l.b16 %v854
    %v934 = vunpack.c.h.b16 %v854
    %v935 = vunpack.c.l.b16 %v855
    %v936 = vunpack.c.h.b16 %v855
    %v937 = vunpack.c.l.b16 %v856
    %v938 = vunpack.c.h.b16 %v856
    %v939 = vunpack.c.l.b16 %v857
    %v940 = vunpack.c.h.b16 %v857
    %v941 = vunpack.c.l.b16 %v858
    %v942 = vunpack.c.h.b16 %v858
    %v943 = vunpack.c.l.b16 %v859
    %v944 = vunpack.c.h.b16 %v859
    %v945 = vunpack.c.l.b16 %v860
    %v946 = vunpack.c.h.b16 %v860
    %v947 = vunpack.c.l.b16 %v861
    %v948 = vunpack.c.h.b16 %v861
    %v949 = vunpack.c.l.b16 %v862
    %v950 = vunpack.c.h.b16 %v862
    %v951 = vunpack.c.l.b16 %v863
    %v952 = vunpack.c.h.b16 %v863
    %v953 = vunpack.c.l.b16 %v864
    %v954 = vunpack.c.h.b16 %v864
    %v955 = vunpack.c.l.b16 %v865
    %v956 = vunpack.c.h.b16 %v865
    %v957 = vunpack.c.l.b16 %v866
    %v958 = vunpack.c.h.b16 %v866
    %v959 = vunpack.c.l.b16 %v867
    %v960 = vunpack.c.h.b16 %v867
    %v961 = vunpack.c.l.b16 %v868
    %v962 = vunpack.c.h.b16 %v868
    %v963 = vunpack.c.l.b16 %v869
    %v964 = vunpack.c.h.b16 %v869
    %v965 = vunpack.c.l.b16 %v870
    %v966 = vunpack.c.h.b16 %v870
    %v967 = vunpack.c.l.b16 %v871
    %v968 = vunpack.c.h.b16 %v871
    %v969 = vunpack.c.l.b16 %v872
    %v970 = vunpack.c.h.b16 %v872
    %v971 = vunpack.c.l.b16 %v873
    %v972 = vunpack.c.h.b16 %v873
    %v973 = vunpack.c.l.b16 %v874
    %v974 = vunpack.c.h.b16 %v874
    %v975 = vunpack.c.l.b16 %v875
    %v976 = vunpack.c.h.b16 %v875
    %v977 = vunpack.c.l.b16 %v876
    %v978 = vunpack.c.h.b16 %v876
    %v979 = vunpack.c.l.b16 %v877
    %v980 = vunpack.c.h.b16 %v877
    %v981 = vunpack.c.l.b16 %v878
    %v982 = vunpack.c.h.b16 %v878
    %v983 = vunpack.c.l.b16 %v879
    %v984 = vunpack.c.h.b16 %v879
    %v985 = vunpack.c.l.b16 %v880
    %v986 = vunpack.c.h.b16 %v880
    %v987 = vunpack.c.l.b16 %v881
    %v988 = vunpack.c.h.b16 %v881
    %v989 = vunpack.c.l.b16 %v882
    %v990 = vunpack.c.h.b16 %v882
    %v991 = vpack.c.b16 %v929, %v927
    %v992 = vpack.c.b16 %v930, %v928
    %v993 = vpack.c.b16 %v933, %v931
    %v994 = vpack.c.b16 %v934, %v932
    %v995 = vpack.c.b16 %v937, %v935
    %v996 = vpack.c.b16 %v938, %v936
    %v997 = vpack.c.b16 %v941, %v939
    %v998 = vpack.c.b16 %v942, %v940
    %v999 = vpack.c.b16 %v945, %v943
    %v1000 = vpack.c.b16 %v946, %v944
    %v1001 = vpack.c.b16 %v949, %v947
    %v1002 = vpack.c.b16 %v950, %v948
    %v1003 = vpack.c.b16 %v953, %v951
    %v1004 = vpack.c.b16 %v954, %v952
    %v1005 = vpack.c.b16 %v957, %v955
    %v1006 = vpack.c.b16 %v958, %v956
    %v1007 = vpack.c.b16 %v961, %v959
    %v1008 = vpack.c.b16 %v962, %v960
    %v1009 = vpack.c.b16 %v965, %v963
    %v1010 = vpack.c.b16 %v966, %v964
    %v1011 = vpack.c.b16 %v969, %v967
    %v1012 = vpack.c.b16 %v970, %v968
    %v1013 = vpack.c.b16 %v973, %v971
    %v1014 = vpack.c.b16 %v974, %v972
    %v1015 = vpack.c.b16 %v977, %v975
    %v1016 = vpack.c.b16 %v978, %v976
    %v1017 = vpack.c.b16 %v981, %v979
    %v1018 = vpack.c.b16 %v982, %v980
    %v1019 = vpack.c.b16 %v985, %v983
    %v1020 = vpack.c.b16 %v986, %v984
    %v1021 = vpack.c.b16 %v989, %v987
    %v1022 = vpack.c.b16 %v990, %v988
    %1055 = vmatprep.subr.bf16.mxu0 %v992
    %1056 = vmatpush1.bf16.msra.mxu0 %v991
    %1057 = vmatprep.subr.bf16.mxu0 %v994
    %1058 = vmatpush1.bf16.msra.mxu0 %v993
    %1059 = vmatprep.subr.bf16.mxu0 %v996
    %1060 = vmatpush1.bf16.msra.mxu0 %v995
    %1061 = vmatprep.subr.bf16.mxu0 %v998
    %1062 = vmatpush1.bf16.msra.mxu0 %v997
    %1063 = vmatprep.subr.bf16.mxu0 %v1000
    %1064 = vmatpush1.bf16.msra.mxu0 %v999
    %1065 = vmatprep.subr.bf16.mxu0 %v1002
    %1066 = vmatpush1.bf16.msra.mxu0 %v1001
    %1067 = vmatprep.subr.bf16.mxu0 %v1004
    %1068 = vmatpush1.bf16.msra.mxu0 %v1003
    %1069 = vmatprep.subr.bf16.mxu0 %v1006
    %1070 = vmatpush1.bf16.msra.mxu0 %v1005
    %1071 = vmatprep.subr.bf16.mxu0 %v1008
    %1072 = vmatpush1.bf16.msra.mxu0 %v1007
    %1073 = vmatprep.subr.bf16.mxu0 %v1010
    %1074 = vmatpush1.bf16.msra.mxu0 %v1009
    %1075 = vmatprep.subr.bf16.mxu0 %v1012
    %1076 = vmatpush1.bf16.msra.mxu0 %v1011
    %1077 = vmatprep.subr.bf16.mxu0 %v1014
    %1078 = vmatpush1.bf16.msra.mxu0 %v1013
    %1079 = vmatprep.subr.bf16.mxu0 %v1016
    %1080 = vmatpush1.bf16.msra.mxu0 %v1015
    %1081 = vmatprep.subr.bf16.mxu0 %v1018
    %1082 = vmatpush1.bf16.msra.mxu0 %v1017
    %1083 = vmatprep.subr.bf16.mxu0 %v1020
    %1084 = vmatpush1.bf16.msra.mxu0 %v1019
    %1085 = vmatprep.subr.bf16.mxu0 %v1022
    %1086 = vmatpush1.bf16.msra.mxu0 %v1021
    %1087 = vmatprep.mubr.bf16.mxu0 %v850
    %1088 = vmatmul.mubr.bf16.gmra.mrb[0].mxu0 %v849
    %v1089 = vpop.f32.mrb[0].mxu0
    %v1090 = vadd.f32 %v888, %v1089
    %v1091 = vpop.f32.mrb[0].mxu0
    %v1092 = vadd.f32 %v892, %v1091
    %v1093 = vpop.f32.mrb[0].mxu0
    %v1094 = vpop.f32.mrb[0].mxu0
    %1095 = vdwg.mxu0
    %v1096 = vtanh.pop %v1090
    %v1097 = vtanh.pop %v1092
    %v1098 = vpack.c.bf16 %v1096, %v1096
    %v1099 = vpack.c.bf16 %v1097, %v1097
    %v1100 = vld [vmem:[%s6] sm:$0xff]
    %v1101 = vld [vmem:[%s6 + $0x8] sm:$0xff]
    %v1102 = vld [vmem:[%s6 + $0x10] sm:$0xff]
    %v1103 = vld [vmem:[%s6 + $0x18] sm:$0xff]
    %v1104 = vld [vmem:[%s6 + $0x20] sm:$0xff]
    %v1105 = vld [vmem:[%s6 + $0x28] sm:$0xff]
    %v1106 = vld [vmem:[%s6 + $0x30] sm:$0xff]
    %v1107 = vld [vmem:[%s6 + $0x38] sm:$0xff]
    %v1108 = vld [vmem:[%s6 + $0x40] sm:$0xff]
    %v1109 = vld [vmem:[%s6 + $0x48] sm:$0xff]
    %v1110 = vld [vmem:[%s6 + $0x50] sm:$0xff]
    %v1111 = vld [vmem:[%s6 + $0x58] sm:$0xff]
    %v1112 = vld [vmem:[%s6 + $0x60] sm:$0xff]
    %v1113 = vld [vmem:[%s6 + $0x68] sm:$0xff]
    %v1114 = vld [vmem:[%s6 + $0x70] sm:$0xff]
    %v1115 = vld [vmem:[%s6 + $0x78] sm:$0xff]
    %v1116 = vld [vmem:[%s6 + $0x80] sm:$0xff]
    %v1117 = vld [vmem:[%s6 + $0x88] sm:$0xff]
    %v1118 = vld [vmem:[%s6 + $0x90] sm:$0xff]
    %v1119 = vld [vmem:[%s6 + $0x98] sm:$0xff]
    %v1120 = vld [vmem:[%s6 + $0xa0] sm:$0xff]
    %v1121 = vld [vmem:[%s6 + $0xa8] sm:$0xff]
    %v1122 = vld [vmem:[%s6 + $0xb0] sm:$0xff]
    %v1123 = vld [vmem:[%s6 + $0xb8] sm:$0xff]
    %v1124 = vld [vmem:[%s6 + $0xc0] sm:$0xff]
    %v1125 = vld [vmem:[%s6 + $0xc8] sm:$0xff]
    %v1126 = vld [vmem:[%s6 + $0xd0] sm:$0xff]
    %v1127 = vld [vmem:[%s6 + $0xd8] sm:$0xff]
    %v1128 = vld [vmem:[%s6 + $0xe0] sm:$0xff]
    %v1129 = vld [vmem:[%s6 + $0xe8] sm:$0xff]
    %v1130 = vld [vmem:[%s6 + $0xf0] sm:$0xff]
    %v1131 = vld [vmem:[%s6 + $0xf8] sm:$0xff]
    %v1132 = vld [vmem:[%s7] sm:$0x3]
    %v1134 = vlaneseq
    %v1135 = vshrl.u32 %v1134, 7
    %v1136 = vsub.s32 0, %v1135
    %v1137 = vrot.slane %v1132, %v1136
    %v1138 = vlaneseq
    %v1139 = vshrl.u32 %v1138, 7
    %v1140 = vsub.s32 1, %v1139
    %v1141 = vrot.slane %v1132, %v1140
    %v1176 = vunpack.c.l.b16 %v1100
    %v1177 = vunpack.c.h.b16 %v1100
    %v1178 = vunpack.c.l.b16 %v1101
    %v1179 = vunpack.c.h.b16 %v1101
    %v1180 = vunpack.c.l.b16 %v1102
    %v1181 = vunpack.c.h.b16 %v1102
    %v1182 = vunpack.c.l.b16 %v1103
    %v1183 = vunpack.c.h.b16 %v1103
    %v1184 = vunpack.c.l.b16 %v1104
    %v1185 = vunpack.c.h.b16 %v1104
    %v1186 = vunpack.c.l.b16 %v1105
    %v1187 = vunpack.c.h.b16 %v1105
    %v1188 = vunpack.c.l.b16 %v1106
    %v1189 = vunpack.c.h.b16 %v1106
    %v1190 = vunpack.c.l.b16 %v1107
    %v1191 = vunpack.c.h.b16 %v1107
    %v1192 = vunpack.c.l.b16 %v1108
    %v1193 = vunpack.c.h.b16 %v1108
    %v1194 = vunpack.c.l.b16 %v1109
    %v1195 = vunpack.c.h.b16 %v1109
    %v1196 = vunpack.c.l.b16 %v1110
    %v1197 = vunpack.c.h.b16 %v1110
    %v1198 = vunpack.c.l.b16 %v1111
    %v1199 = vunpack.c.h.b16 %v1111
    %v1200 = vunpack.c.l.b16 %v1112
    %v1201 = vunpack.c.h.b16 %v1112
    %v1202 = vunpack.c.l.b16 %v1113
    %v1203 = vunpack.c.h.b16 %v1113
    %v1204 = vunpack.c.l.b16 %v1114
    %v1205 = vunpack.c.h.b16 %v1114
    %v1206 = vunpack.c.l.b16 %v1115
    %v1207 = vunpack.c.h.b16 %v1115
    %v1208 = vunpack.c.l.b16 %v1116
    %v1209 = vunpack.c.h.b16 %v1116
    %v1210 = vunpack.c.l.b16 %v1117
    %v1211 = vunpack.c.h.b16 %v1117
    %v1212 = vunpack.c.l.b16 %v1118
    %v1213 = vunpack.c.h.b16 %v1118
    %v1214 = vunpack.c.l.b16 %v1119
    %v1215 = vunpack.c.h.b16 %v1119
    %v1216 = vunpack.c.l.b16 %v1120
    %v1217 = vunpack.c.h.b16 %v1120
    %v1218 = vunpack.c.l.b16 %v1121
    %v1219 = vunpack.c.h.b16 %v1121
    %v1220 = vunpack.c.l.b16 %v1122
    %v1221 = vunpack.c.h.b16 %v1122
    %v1222 = vunpack.c.l.b16 %v1123
    %v1223 = vunpack.c.h.b16 %v1123
    %v1224 = vunpack.c.l.b16 %v1124
    %v1225 = vunpack.c.h.b16 %v1124
    %v1226 = vunpack.c.l.b16 %v1125
    %v1227 = vunpack.c.h.b16 %v1125
    %v1228 = vunpack.c.l.b16 %v1126
    %v1229 = vunpack.c.h.b16 %v1126
    %v1230 = vunpack.c.l.b16 %v1127
    %v1231 = vunpack.c.h.b16 %v1127
    %v1232 = vunpack.c.l.b16 %v1128
    %v1233 = vunpack.c.h.b16 %v1128
    %v1234 = vunpack.c.l.b16 %v1129
    %v1235 = vunpack.c.h.b16 %v1129
    %v1236 = vunpack.c.l.b16 %v1130
    %v1237 = vunpack.c.h.b16 %v1130
    %v1238 = vunpack.c.l.b16 %v1131
    %v1239 = vunpack.c.h.b16 %v1131
    %v1240 = vpack.c.b16 %v1178, %v1176
    %v1241 = vpack.c.b16 %v1179, %v1177
    %v1242 = vpack.c.b16 %v1182, %v1180
    %v1243 = vpack.c.b16 %v1183, %v1181
    %v1244 = vpack.c.b16 %v1186, %v1184
    %v1245 = vpack.c.b16 %v1187, %v1185
    %v1246 = vpack.c.b16 %v1190, %v1188
    %v1247 = vpack.c.b16 %v1191, %v1189
    %v1248 = vpack.c.b16 %v1194, %v1192
    %v1249 = vpack.c.b16 %v1195, %v1193
    %v1250 = vpack.c.b16 %v1198, %v1196
    %v1251 = vpack.c.b16 %v1199, %v1197
    %v1252 = vpack.c.b16 %v1202, %v1200
    %v1253 = vpack.c.b16 %v1203, %v1201
    %v1254 = vpack.c.b16 %v1206, %v1204
    %v1255 = vpack.c.b16 %v1207, %v1205
    %v1256 = vpack.c.b16 %v1210, %v1208
    %v1257 = vpack.c.b16 %v1211, %v1209
    %v1258 = vpack.c.b16 %v1214, %v1212
    %v1259 = vpack.c.b16 %v1215, %v1213
    %v1260 = vpack.c.b16 %v1218, %v1216
    %v1261 = vpack.c.b16 %v1219, %v1217
    %v1262 = vpack.c.b16 %v1222, %v1220
    %v1263 = vpack.c.b16 %v1223, %v1221
    %v1264 = vpack.c.b16 %v1226, %v1224
    %v1265 = vpack.c.b16 %v1227, %v1225
    %v1266 = vpack.c.b16 %v1230, %v1228
    %v1267 = vpack.c.b16 %v1231, %v1229
    %v1268 = vpack.c.b16 %v1234, %v1232
    %v1269 = vpack.c.b16 %v1235, %v1233
    %v1270 = vpack.c.b16 %v1238, %v1236
    %v1271 = vpack.c.b16 %v1239, %v1237
    %1304 = vmatprep.subr.bf16.mxu0 %v1241
    %1305 = vmatpush1.bf16.msra.mxu0 %v1240
    %1306 = vmatprep.subr.bf16.mxu0 %v1243
    %1307 = vmatpush1.bf16.msra.mxu0 %v1242
    %1308 = vmatprep.subr.bf16.mxu0 %v1245
    %1309 = vmatpush1.bf16.msra.mxu0 %v1244
    %1310 = vmatprep.subr.bf16.mxu0 %v1247
    %1311 = vmatpush1.bf16.msra.mxu0 %v1246
    %1312 = vmatprep.subr.bf16.mxu0 %v1249
    %1313 = vmatpush1.bf16.msra.mxu0 %v1248
    %1314 = vmatprep.subr.bf16.mxu0 %v1251
    %1315 = vmatpush1.bf16.msra.mxu0 %v1250
    %1316 = vmatprep.subr.bf16.mxu0 %v1253
    %1317 = vmatpush1.bf16.msra.mxu0 %v1252
    %1318 = vmatprep.subr.bf16.mxu0 %v1255
    %1319 = vmatpush1.bf16.msra.mxu0 %v1254
    %1320 = vmatprep.subr.bf16.mxu0 %v1257
    %1321 = vmatpush1.bf16.msra.mxu0 %v1256
    %1322 = vmatprep.subr.bf16.mxu0 %v1259
    %1323 = vmatpush1.bf16.msra.mxu0 %v1258
    %1324 = vmatprep.subr.bf16.mxu0 %v1261
    %1325 = vmatpush1.bf16.msra.mxu0 %v1260
    %1326 = vmatprep.subr.bf16.mxu0 %v1263
    %1327 = vmatpush1.bf16.msra.mxu0 %v1262
    %1328 = vmatprep.subr.bf16.mxu0 %v1265
    %1329 = vmatpush1.bf16.msra.mxu0 %v1264
    %1330 = vmatprep.subr.bf16.mxu0 %v1267
    %1331 = vmatpush1.bf16.msra.mxu0 %v1266
    %1332 = vmatprep.subr.bf16.mxu0 %v1269
    %1333 = vmatpush1.bf16.msra.mxu0 %v1268
    %1334 = vmatprep.subr.bf16.mxu0 %v1271
    %1335 = vmatpush1.bf16.msra.mxu0 %v1270
    %1336 = vmatprep.mubr.bf16.mxu0 %v1099
    %1337 = vmatmul.mubr.bf16.gmra.mrb[0].mxu0 %v1098
    %v1338 = vpop.f32.mrb[0].mxu0
    %v1339 = vadd.f32 %v1137, %v1338
    %v1340 = vpop.f32.mrb[0].mxu0
    %v1341 = vadd.f32 %v1141, %v1340
    %v1342 = vpop.f32.mrb[0].mxu0
    %v1343 = vpop.f32.mrb[0].mxu0
    %1344 = vdwg.mxu0
    %v1345 = vld [vmem:[%s1] sm:$0xff]
    %v1346 = vmul.f32 %v1341, 1.442695
    %v1347 = vpow.pop %v1346
    %v1348 = vmul.f32 %v1345, %v1347
    %v1349 = vadd.f32 %v1339, %v1348
    %v1350 = vpack.c.bf16 %v1349, %v1349
    %v1351 = vld [vmem:[%s8] sm:$0xff]
    %v1352 = vld [vmem:[%s8 + $0x8] sm:$0xff]
    %v1353 = vld [vmem:[%s8 + $0x10] sm:$0xff]
    %v1354 = vld [vmem:[%s8 + $0x18] sm:$0xff]
    %v1355 = vld [vmem:[%s8 + $0x20] sm:$0xff]
    %v1356 = vld [vmem:[%s8 + $0x28] sm:$0xff]
    %v1357 = vld [vmem:[%s8 + $0x30] sm:$0xff]
    %v1358 = vld [vmem:[%s8 + $0x38] sm:$0xff]
    %v1359 = vld [vmem:[%s8 + $0x40] sm:$0xff]
    %v1360 = vld [vmem:[%s8 + $0x48] sm:$0xff]
    %v1361 = vld [vmem:[%s8 + $0x50] sm:$0xff]
    %v1362 = vld [vmem:[%s8 + $0x58] sm:$0xff]
    %v1363 = vld [vmem:[%s8 + $0x60] sm:$0xff]
    %v1364 = vld [vmem:[%s8 + $0x68] sm:$0xff]
    %v1365 = vld [vmem:[%s8 + $0x70] sm:$0xff]
    %v1366 = vld [vmem:[%s8 + $0x78] sm:$0xff]
    %v1367 = vld [vmem:[%s9] sm:$0x3]
    %v1369 = vlaneseq
    %v1370 = vshrl.u32 %v1369, 7
    %v1371 = vsub.s32 0, %v1370
    %v1372 = vrot.slane %v1367, %v1371
    %v1373 = vlaneseq
    %v1374 = vshrl.u32 %v1373, 7
    %v1375 = vsub.s32 1, %v1374
    %v1376 = vrot.slane %v1367, %v1375
    %v1395 = vunpack.c.l.b16 %v1351
    %v1396 = vunpack.c.h.b16 %v1351
    %v1397 = vunpack.c.l.b16 %v1352
    %v1398 = vunpack.c.h.b16 %v1352
    %v1399 = vunpack.c.l.b16 %v1353
    %v1400 = vunpack.c.h.b16 %v1353
    %v1401 = vunpack.c.l.b16 %v1354
    %v1402 = vunpack.c.h.b16 %v1354
    %v1403 = vunpack.c.l.b16 %v1355
    %v1404 = vunpack.c.h.b16 %v1355
    %v1405 = vunpack.c.l.b16 %v1356
    %v1406 = vunpack.c.h.b16 %v1356
    %v1407 = vunpack.c.l.b16 %v1357
    %v1408 = vunpack.c.h.b16 %v1357
    %v1409 = vunpack.c.l.b16 %v1358
    %v1410 = vunpack.c.h.b16 %v1358
    %v1411 = vunpack.c.l.b16 %v1359
    %v1412 = vunpack.c.h.b16 %v1359
    %v1413 = vunpack.c.l.b16 %v1360
    %v1414 = vunpack.c.h.b16 %v1360
    %v1415 = vunpack.c.l.b16 %v1361
    %v1416 = vunpack.c.h.b16 %v1361
    %v1417 = vunpack.c.l.b16 %v1362
    %v1418 = vunpack.c.h.b16 %v1362
    %v1419 = vunpack.c.l.b16 %v1363
    %v1420 = vunpack.c.h.b16 %v1363
    %v1421 = vunpack.c.l.b16 %v1364
    %v1422 = vunpack.c.h.b16 %v1364
    %v1423 = vunpack.c.l.b16 %v1365
    %v1424 = vunpack.c.h.b16 %v1365
    %v1425 = vunpack.c.l.b16 %v1366
    %v1426 = vunpack.c.h.b16 %v1366
    %v1427 = vpack.c.b16 %v1397, %v1395
    %v1428 = vpack.c.b16 %v1398, %v1396
    %v1429 = vpack.c.b16 %v1401, %v1399
    %v1430 = vpack.c.b16 %v1402, %v1400
    %v1431 = vpack.c.b16 %v1405, %v1403
    %v1432 = vpack.c.b16 %v1406, %v1404
    %v1433 = vpack.c.b16 %v1409, %v1407
    %v1434 = vpack.c.b16 %v1410, %v1408
    %v1435 = vpack.c.b16 %v1413, %v1411
    %v1436 = vpack.c.b16 %v1414, %v1412
    %v1437 = vpack.c.b16 %v1417, %v1415
    %v1438 = vpack.c.b16 %v1418, %v1416
    %v1439 = vpack.c.b16 %v1421, %v1419
    %v1440 = vpack.c.b16 %v1422, %v1420
    %v1441 = vpack.c.b16 %v1425, %v1423
    %v1442 = vpack.c.b16 %v1426, %v1424
    %1459 = vmatprep.subr.bf16.mxu0 %v1428
    %1460 = vmatpush1.bf16.msra.mxu0 %v1427
    %1461 = vmatprep.subr.bf16.mxu0 %v1430
    %1462 = vmatpush1.bf16.msra.mxu0 %v1429
    %1463 = vmatprep.subr.bf16.mxu0 %v1432
    %1464 = vmatpush1.bf16.msra.mxu0 %v1431
    %1465 = vmatprep.subr.bf16.mxu0 %v1434
    %1466 = vmatpush1.bf16.msra.mxu0 %v1433
    %1467 = vmatprep.subr.bf16.mxu0 %v1436
    %1468 = vmatpush1.bf16.msra.mxu0 %v1435
    %1469 = vmatprep.subr.bf16.mxu0 %v1438
    %1470 = vmatpush1.bf16.msra.mxu0 %v1437
    %1471 = vmatprep.subr.bf16.mxu0 %v1440
    %1472 = vmatpush1.bf16.msra.mxu0 %v1439
    %1473 = vmatprep.subr.bf16.mxu0 %v1442
    %1474 = vmatpush1.bf16.msra.mxu0 %v1441
    %1475 = vmatprep.subr.bf16.mxu0 0
    %1476 = vmatpush1.bf16.msra.mxu0 0
    %1477 = vmatprep.subr.bf16.mxu0 0
    %1478 = vmatpush1.bf16.msra.mxu0 0
    %1479 = vmatprep.subr.bf16.mxu0 0
    %1480 = vmatpush1.bf16.msra.mxu0 0
    %1481 = vmatprep.subr.bf16.mxu0 0
    %1482 = vmatpush1.bf16.msra.mxu0 0
    %1483 = vmatprep.subr.bf16.mxu0 0
    %1484 = vmatpush1.bf16.msra.mxu0 0
    %1485 = vmatprep.subr.bf16.mxu0 0
    %1486 = vmatpush1.bf16.msra.mxu0 0
    %1487 = vmatprep.subr.bf16.mxu0 0
    %1488 = vmatpush1.bf16.msra.mxu0 0
    %1489 = vmatprep.subr.bf16.mxu0 0
    %1490 = vmatpush1.bf16.msra.mxu0 0
    %1491 = vmatprep.mubr.bf16.mxu0 0
    %1492 = vmatmul.mubr.bf16.gmra.mrb[0].mxu0 %v1350
    %v1493 = vpop.f32.mrb[0].mxu0
    %v1494 = vadd.f32 %v1372, %v1493
    %v1495 = vpop.f32.mrb[0].mxu0
    %v1496 = vadd.f32 %v1376, %v1495
    %v1497 = vpop.f32.mrb[0].mxu0
    %v1498 = vpop.f32.mrb[0].mxu0
    %1499 = vdwg.mxu0
    %v1500 = vtanh.pop %v1494
    %v1501 = vtanh.pop %v1496
    %v1502 = vpack.c.bf16 %v1500, %v1500
    %v1503 = vpack.c.bf16 %v1501, %v1501
    %v1504 = vld [vmem:[%s10] sm:$0xff]
    %v1505 = vld [vmem:[%s10 + $0x8] sm:$0xff]
    %v1506 = vld [vmem:[%s10 + $0x10] sm:$0xff]
    %v1507 = vld [vmem:[%s10 + $0x18] sm:$0xff]
    %v1508 = vld [vmem:[%s10 + $0x20] sm:$0xff]
    %v1509 = vld [vmem:[%s10 + $0x28] sm:$0xff]
    %v1510 = vld [vmem:[%s10 + $0x30] sm:$0xff]
    %v1511 = vld [vmem:[%s10 + $0x38] sm:$0xff]
    %v1512 = vld [vmem:[%s10 + $0x40] sm:$0xff]
    %v1513 = vld [vmem:[%s10 + $0x48] sm:$0xff]
    %v1514 = vld [vmem:[%s10 + $0x50] sm:$0xff]
    %v1515 = vld [vmem:[%s10 + $0x58] sm:$0xff]
    %v1516 = vld [vmem:[%s10 + $0x60] sm:$0xff]
    %v1517 = vld [vmem:[%s10 + $0x68] sm:$0xff]
    %v1518 = vld [vmem:[%s10 + $0x70] sm:$0xff]
    %v1519 = vld [vmem:[%s10 + $0x78] sm:$0xff]
    %v1520 = vld [vmem:[%s10 + $0x80] sm:$0xff]
    %v1521 = vld [vmem:[%s10 + $0x88] sm:$0xff]
    %v1522 = vld [vmem:[%s10 + $0x90] sm:$0xff]
    %v1523 = vld [vmem:[%s10 + $0x98] sm:$0xff]
    %v1524 = vld [vmem:[%s10 + $0xa0] sm:$0xff]
    %v1525 = vld [vmem:[%s10 + $0xa8] sm:$0xff]
    %v1526 = vld [vmem:[%s10 + $0xb0] sm:$0xff]
    %v1527 = vld [vmem:[%s10 + $0xb8] sm:$0xff]
    %v1528 = vld [vmem:[%s10 + $0xc0] sm:$0xff]
    %v1529 = vld [vmem:[%s10 + $0xc8] sm:$0xff]
    %v1530 = vld [vmem:[%s10 + $0xd0] sm:$0xff]
    %v1531 = vld [vmem:[%s10 + $0xd8] sm:$0xff]
    %v1532 = vld [vmem:[%s10 + $0xe0] sm:$0xff]
    %v1533 = vld [vmem:[%s10 + $0xe8] sm:$0xff]
    %v1534 = vld [vmem:[%s10 + $0xf0] sm:$0xff]
    %v1535 = vld [vmem:[%s10 + $0xf8] sm:$0xff]
    %v1536 = vld [vmem:[%s11] sm:$0x3]
    %v1538 = vlaneseq
    %v1539 = vshrl.u32 %v1538, 7
    %v1540 = vsub.s32 0, %v1539
    %v1541 = vrot.slane %v1536, %v1540
    %v1542 = vlaneseq
    %v1543 = vshrl.u32 %v1542, 7
    %v1544 = vsub.s32 1, %v1543
    %v1545 = vrot.slane %v1536, %v1544
    %v1580 = vunpack.c.l.b16 %v1504
    %v1581 = vunpack.c.h.b16 %v1504
    %v1582 = vunpack.c.l.b16 %v1505
    %v1583 = vunpack.c.h.b16 %v1505
    %v1584 = vunpack.c.l.b16 %v1506
    %v1585 = vunpack.c.h.b16 %v1506
    %v1586 = vunpack.c.l.b16 %v1507
    %v1587 = vunpack.c.h.b16 %v1507
    %v1588 = vunpack.c.l.b16 %v1508
    %v1589 = vunpack.c.h.b16 %v1508
    %v1590 = vunpack.c.l.b16 %v1509
    %v1591 = vunpack.c.h.b16 %v1509
    %v1592 = vunpack.c.l.b16 %v1510
    %v1593 = vunpack.c.h.b16 %v1510
    %v1594 = vunpack.c.l.b16 %v1511
    %v1595 = vunpack.c.h.b16 %v1511
    %v1596 = vunpack.c.l.b16 %v1512
    %v1597 = vunpack.c.h.b16 %v1512
    %v1598 = vunpack.c.l.b16 %v1513
    %v1599 = vunpack.c.h.b16 %v1513
    %v1600 = vunpack.c.l.b16 %v1514
    %v1601 = vunpack.c.h.b16 %v1514
    %v1602 = vunpack.c.l.b16 %v1515
    %v1603 = vunpack.c.h.b16 %v1515
    %v1604 = vunpack.c.l.b16 %v1516
    %v1605 = vunpack.c.h.b16 %v1516
    %v1606 = vunpack.c.l.b16 %v1517
    %v1607 = vunpack.c.h.b16 %v1517
    %v1608 = vunpack.c.l.b16 %v1518
    %v1609 = vunpack.c.h.b16 %v1518
    %v1610 = vunpack.c.l.b16 %v1519
    %v1611 = vunpack.c.h.b16 %v1519
    %v1612 = vunpack.c.l.b16 %v1520
    %v1613 = vunpack.c.h.b16 %v1520
    %v1614 = vunpack.c.l.b16 %v1521
    %v1615 = vunpack.c.h.b16 %v1521
    %v1616 = vunpack.c.l.b16 %v1522
    %v1617 = vunpack.c.h.b16 %v1522
    %v1618 = vunpack.c.l.b16 %v1523
    %v1619 = vunpack.c.h.b16 %v1523
    %v1620 = vunpack.c.l.b16 %v1524
    %v1621 = vunpack.c.h.b16 %v1524
    %v1622 = vunpack.c.l.b16 %v1525
    %v1623 = vunpack.c.h.b16 %v1525
    %v1624 = vunpack.c.l.b16 %v1526
    %v1625 = vunpack.c.h.b16 %v1526
    %v1626 = vunpack.c.l.b16 %v1527
    %v1627 = vunpack.c.h.b16 %v1527
    %v1628 = vunpack.c.l.b16 %v1528
    %v1629 = vunpack.c.h.b16 %v1528
    %v1630 = vunpack.c.l.b16 %v1529
    %v1631 = vunpack.c.h.b16 %v1529
    %v1632 = vunpack.c.l.b16 %v1530
    %v1633 = vunpack.c.h.b16 %v1530
    %v1634 = vunpack.c.l.b16 %v1531
    %v1635 = vunpack.c.h.b16 %v1531
    %v1636 = vunpack.c.l.b16 %v1532
    %v1637 = vunpack.c.h.b16 %v1532
    %v1638 = vunpack.c.l.b16 %v1533
    %v1639 = vunpack.c.h.b16 %v1533
    %v1640 = vunpack.c.l.b16 %v1534
    %v1641 = vunpack.c.h.b16 %v1534
    %v1642 = vunpack.c.l.b16 %v1535
    %v1643 = vunpack.c.h.b16 %v1535
    %v1644 = vpack.c.b16 %v1582, %v1580
    %v1645 = vpack.c.b16 %v1583, %v1581
    %v1646 = vpack.c.b16 %v1586, %v1584
    %v1647 = vpack.c.b16 %v1587, %v1585
    %v1648 = vpack.c.b16 %v1590, %v1588
    %v1649 = vpack.c.b16 %v1591, %v1589
    %v1650 = vpack.c.b16 %v1594, %v1592
    %v1651 = vpack.c.b16 %v1595, %v1593
    %v1652 = vpack.c.b16 %v1598, %v1596
    %v1653 = vpack.c.b16 %v1599, %v1597
    %v1654 = vpack.c.b16 %v1602, %v1600
    %v1655 = vpack.c.b16 %v1603, %v1601
    %v1656 = vpack.c.b16 %v1606, %v1604
    %v1657 = vpack.c.b16 %v1607, %v1605
    %v1658 = vpack.c.b16 %v1610, %v1608
    %v1659 = vpack.c.b16 %v1611, %v1609
    %v1660 = vpack.c.b16 %v1614, %v1612
    %v1661 = vpack.c.b16 %v1615, %v1613
    %v1662 = vpack.c.b16 %v1618, %v1616
    %v1663 = vpack.c.b16 %v1619, %v1617
    %v1664 = vpack.c.b16 %v1622, %v1620
    %v1665 = vpack.c.b16 %v1623, %v1621
    %v1666 = vpack.c.b16 %v1626, %v1624
    %v1667 = vpack.c.b16 %v1627, %v1625
    %v1668 = vpack.c.b16 %v1630, %v1628
    %v1669 = vpack.c.b16 %v1631, %v1629
    %v1670 = vpack.c.b16 %v1634, %v1632
    %v1671 = vpack.c.b16 %v1635, %v1633
    %v1672 = vpack.c.b16 %v1638, %v1636
    %v1673 = vpack.c.b16 %v1639, %v1637
    %v1674 = vpack.c.b16 %v1642, %v1640
    %v1675 = vpack.c.b16 %v1643, %v1641
    %1708 = vmatprep.subr.bf16.mxu0 %v1645
    %1709 = vmatpush1.bf16.msra.mxu0 %v1644
    %1710 = vmatprep.subr.bf16.mxu0 %v1647
    %1711 = vmatpush1.bf16.msra.mxu0 %v1646
    %1712 = vmatprep.subr.bf16.mxu0 %v1649
    %1713 = vmatpush1.bf16.msra.mxu0 %v1648
    %1714 = vmatprep.subr.bf16.mxu0 %v1651
    %1715 = vmatpush1.bf16.msra.mxu0 %v1650
    %1716 = vmatprep.subr.bf16.mxu0 %v1653
    %1717 = vmatpush1.bf16.msra.mxu0 %v1652
    %1718 = vmatprep.subr.bf16.mxu0 %v1655
    %1719 = vmatpush1.bf16.msra.mxu0 %v1654
    %1720 = vmatprep.subr.bf16.mxu0 %v1657
    %1721 = vmatpush1.bf16.msra.mxu0 %v1656
    %1722 = vmatprep.subr.bf16.mxu0 %v1659
    %1723 = vmatpush1.bf16.msra.mxu0 %v1658
    %1724 = vmatprep.subr.bf16.mxu0 %v1661
    %1725 = vmatpush1.bf16.msra.mxu0 %v1660
    %1726 = vmatprep.subr.bf16.mxu0 %v1663
    %1727 = vmatpush1.bf16.msra.mxu0 %v1662
    %1728 = vmatprep.subr.bf16.mxu0 %v1665
    %1729 = vmatpush1.bf16.msra.mxu0 %v1664
    %1730 = vmatprep.subr.bf16.mxu0 %v1667
    %1731 = vmatpush1.bf16.msra.mxu0 %v1666
    %1732 = vmatprep.subr.bf16.mxu0 %v1669
    %1733 = vmatpush1.bf16.msra.mxu0 %v1668
    %1734 = vmatprep.subr.bf16.mxu0 %v1671
    %1735 = vmatpush1.bf16.msra.mxu0 %v1670
    %1736 = vmatprep.subr.bf16.mxu0 %v1673
    %1737 = vmatpush1.bf16.msra.mxu0 %v1672
    %1738 = vmatprep.subr.bf16.mxu0 %v1675
    %1739 = vmatpush1.bf16.msra.mxu0 %v1674
    %1740 = vmatprep.mubr.bf16.mxu0 %v1503
    %1741 = vmatmul.mubr.bf16.gmra.mrb[0].mxu0 %v1502
    %v1742 = vpop.f32.mrb[0].mxu0
    %v1743 = vadd.f32 %v1541, %v1742
    %v1744 = vpop.f32.mrb[0].mxu0
    %v1745 = vadd.f32 %v1545, %v1744
    %v1746 = vpop.f32.mrb[0].mxu0
    %v1747 = vpop.f32.mrb[0].mxu0
    %1748 = vdwg.mxu0
    %v1749 = vtanh.pop %v1743
    %v1750 = vtanh.pop %v1745
    %v1751 = vpack.c.bf16 %v1749, %v1749
    %v1752 = vpack.c.bf16 %v1750, %v1750
    %v1753 = vld [vmem:[%s12] sm:$0xff]
    %v1754 = vld [vmem:[%s12 + $0x8] sm:$0xff]
    %v1755 = vld [vmem:[%s12 + $0x10] sm:$0xff]
    %v1756 = vld [vmem:[%s12 + $0x18] sm:$0xf]
    %v1757 = vld [vmem:[%s12 + $0x1c] sm:$0xff]
    %v1758 = vld [vmem:[%s12 + $0x24] sm:$0xff]
    %v1759 = vld [vmem:[%s12 + $0x2c] sm:$0xff]
    %v1760 = vld [vmem:[%s12 + $0x34] sm:$0xf]
    %v1761 = vld [vmem:[%s12 + $0x38] sm:$0xff]
    %v1762 = vld [vmem:[%s12 + $0x40] sm:$0xff]
    %v1763 = vld [vmem:[%s12 + $0x48] sm:$0xff]
    %v1764 = vld [vmem:[%s12 + $0x50] sm:$0xf]
    %v1765 = vld [vmem:[%s12 + $0x54] sm:$0xff]
    %v1766 = vld [vmem:[%s12 + $0x5c] sm:$0xff]
    %v1767 = vld [vmem:[%s12 + $0x64] sm:$0xff]
    %v1768 = vld [vmem:[%s12 + $0x6c] sm:$0xf]
    %v1769 = vld [vmem:[%s12 + $0x70] sm:$0xff]
    %v1770 = vld [vmem:[%s12 + $0x78] sm:$0xff]
    %v1771 = vld [vmem:[%s12 + $0x80] sm:$0xff]
    %v1772 = vld [vmem:[%s12 + $0x88] sm:$0xf]
    %v1773 = vld [vmem:[%s12 + $0x8c] sm:$0xff]
    %v1774 = vld [vmem:[%s12 + $0x94] sm:$0xff]
    %v1775 = vld [vmem:[%s12 + $0x9c] sm:$0xff]
    %v1776 = vld [vmem:[%s12 + $0xa4] sm:$0xf]
    %v1777 = vld [vmem:[%s12 + $0xa8] sm:$0xff]
    %v1778 = vld [vmem:[%s12 + $0xb0] sm:$0xff]
    %v1779 = vld [vmem:[%s12 + $0xb8] sm:$0xff]
    %v1780 = vld [vmem:[%s12 + $0xc0] sm:$0xf]
    %v1781 = vld [vmem:[%s12 + $0xc4] sm:$0xff]
    %v1782 = vld [vmem:[%s12 + $0xcc] sm:$0xff]
    %v1783 = vld [vmem:[%s12 + $0xd4] sm:$0xff]
    %v1784 = vld [vmem:[%s12 + $0xdc] sm:$0xf]
    %v1785 = vld [vmem:[%s12 + $0xe0] sm:$0xff]
    %v1786 = vld [vmem:[%s12 + $0xe8] sm:$0xff]
    %v1787 = vld [vmem:[%s12 + $0xf0] sm:$0xff]
    %v1788 = vld [vmem:[%s12 + $0xf8] sm:$0xf]
    %v1789 = vld [vmem:[%s12 + $0xfc] sm:$0xff]
    %v1790 = vld [vmem:[%s12 + $0x104] sm:$0xff]
    %v1791 = vld [vmem:[%s12 + $0x10c] sm:$0xff]
    %v1792 = vld [vmem:[%s12 + $0x114] sm:$0xf]
    %v1793 = vld [vmem:[%s12 + $0x118] sm:$0xff]
    %v1794 = vld [vmem:[%s12 + $0x120] sm:$0xff]
    %v1795 = vld [vmem:[%s12 + $0x128] sm:$0xff]
    %v1796 = vld [vmem:[%s12 + $0x130] sm:$0xf]
    %v1797 = vld [vmem:[%s12 + $0x134] sm:$0xff]
    %v1798 = vld [vmem:[%s12 + $0x13c] sm:$0xff]
    %v1799 = vld [vmem:[%s12 + $0x144] sm:$0xff]
    %v1800 = vld [vmem:[%s12 + $0x14c] sm:$0xf]
    %v1801 = vld [vmem:[%s12 + $0x150] sm:$0xff]
    %v1802 = vld [vmem:[%s12 + $0x158] sm:$0xff]
    %v1803 = vld [vmem:[%s12 + $0x160] sm:$0xff]
    %v1804 = vld [vmem:[%s12 + $0x168] sm:$0xf]
    %v1805 = vld [vmem:[%s12 + $0x16c] sm:$0xff]
    %v1806 = vld [vmem:[%s12 + $0x174] sm:$0xff]
    %v1807 = vld [vmem:[%s12 + $0x17c] sm:$0xff]
    %v1808 = vld [vmem:[%s12 + $0x184] sm:$0xf]
    %v1809 = vld [vmem:[%s12 + $0x188] sm:$0xff]
    %v1810 = vld [vmem:[%s12 + $0x190] sm:$0xff]
    %v1811 = vld [vmem:[%s12 + $0x198] sm:$0xff]
    %v1812 = vld [vmem:[%s12 + $0x1a0] sm:$0xf]
    %v1813 = vld [vmem:[%s12 + $0x1a4] sm:$0xff]
    %v1814 = vld [vmem:[%s12 + $0x1ac] sm:$0xff]
    %v1815 = vld [vmem:[%s12 + $0x1b4] sm:$0xff]
    %v1816 = vld [vmem:[%s12 + $0x1bc] sm:$0xf]
    %v1817 = vld [vmem:[%s12 + $0x1c0] sm:$0xff]
    %v1818 = vld [vmem:[%s12 + $0x1c8] sm:$0xff]
    %v1819 = vld [vmem:[%s12 + $0x1d0] sm:$0xff]
    %v1820 = vld [vmem:[%s12 + $0x1d8] sm:$0xf]
    %v1821 = vld [vmem:[%s12 + $0x1dc] sm:$0xff]
    %v1822 = vld [vmem:[%s12 + $0x1e4] sm:$0xff]
    %v1823 = vld [vmem:[%s12 + $0x1ec] sm:$0xff]
    %v1824 = vld [vmem:[%s12 + $0x1f4] sm:$0xf]
    %v1825 = vld [vmem:[%s12 + $0x1f8] sm:$0xff]
    %v1826 = vld [vmem:[%s12 + $0x200] sm:$0xff]
    %v1827 = vld [vmem:[%s12 + $0x208] sm:$0xff]
    %v1828 = vld [vmem:[%s12 + $0x210] sm:$0xf]
    %v1829 = vld [vmem:[%s12 + $0x214] sm:$0xff]
    %v1830 = vld [vmem:[%s12 + $0x21c] sm:$0xff]
    %v1831 = vld [vmem:[%s12 + $0x224] sm:$0xff]
    %v1832 = vld [vmem:[%s12 + $0x22c] sm:$0xf]
    %v1833 = vld [vmem:[%s12 + $0x230] sm:$0xff]
    %v1834 = vld [vmem:[%s12 + $0x238] sm:$0xff]
    %v1835 = vld [vmem:[%s12 + $0x240] sm:$0xff]
    %v1836 = vld [vmem:[%s12 + $0x248] sm:$0xf]
    %v1837 = vld [vmem:[%s12 + $0x24c] sm:$0xff]
    %v1838 = vld [vmem:[%s12 + $0x254] sm:$0xff]
    %v1839 = vld [vmem:[%s12 + $0x25c] sm:$0xff]
    %v1840 = vld [vmem:[%s12 + $0x264] sm:$0xf]
    %v1841 = vld [vmem:[%s12 + $0x268] sm:$0xff]
    %v1842 = vld [vmem:[%s12 + $0x270] sm:$0xff]
    %v1843 = vld [vmem:[%s12 + $0x278] sm:$0xff]
    %v1844 = vld [vmem:[%s12 + $0x280] sm:$0xf]
    %v1845 = vld [vmem:[%s12 + $0x284] sm:$0xff]
    %v1846 = vld [vmem:[%s12 + $0x28c] sm:$0xff]
    %v1847 = vld [vmem:[%s12 + $0x294] sm:$0xff]
    %v1848 = vld [vmem:[%s12 + $0x29c] sm:$0xf]
    %v1849 = vld [vmem:[%s12 + $0x2a0] sm:$0xff]
    %v1850 = vld [vmem:[%s12 + $0x2a8] sm:$0xff]
    %v1851 = vld [vmem:[%s12 + $0x2b0] sm:$0xff]
    %v1852 = vld [vmem:[%s12 + $0x2b8] sm:$0xf]
    %v1853 = vld [vmem:[%s12 + $0x2bc] sm:$0xff]
    %v1854 = vld [vmem:[%s12 + $0x2c4] sm:$0xff]
    %v1855 = vld [vmem:[%s12 + $0x2cc] sm:$0xff]
    %v1856 = vld [vmem:[%s12 + $0x2d4] sm:$0xf]
    %v1857 = vld [vmem:[%s12 + $0x2d8] sm:$0xff]
    %v1858 = vld [vmem:[%s12 + $0x2e0] sm:$0xff]
    %v1859 = vld [vmem:[%s12 + $0x2e8] sm:$0xff]
    %v1860 = vld [vmem:[%s12 + $0x2f0] sm:$0xf]
    %v1861 = vld [vmem:[%s12 + $0x2f4] sm:$0xff]
    %v1862 = vld [vmem:[%s12 + $0x2fc] sm:$0xff]
    %v1863 = vld [vmem:[%s12 + $0x304] sm:$0xff]
    %v1864 = vld [vmem:[%s12 + $0x30c] sm:$0xf]
    %v1865 = vld [vmem:[%s12 + $0x310] sm:$0xff]
    %v1866 = vld [vmem:[%s12 + $0x318] sm:$0xff]
    %v1867 = vld [vmem:[%s12 + $0x320] sm:$0xff]
    %v1868 = vld [vmem:[%s12 + $0x328] sm:$0xf]
    %v1869 = vld [vmem:[%s12 + $0x32c] sm:$0xff]
    %v1870 = vld [vmem:[%s12 + $0x334] sm:$0xff]
    %v1871 = vld [vmem:[%s12 + $0x33c] sm:$0xff]
    %v1872 = vld [vmem:[%s12 + $0x344] sm:$0xf]
    %v1873 = vld [vmem:[%s12 + $0x348] sm:$0xff]
    %v1874 = vld [vmem:[%s12 + $0x350] sm:$0xff]
    %v1875 = vld [vmem:[%s12 + $0x358] sm:$0xff]
    %v1876 = vld [vmem:[%s12 + $0x360] sm:$0xf]
    %v1877 = vld [vmem:[%s12 + $0x364] sm:$0xff]
    %v1878 = vld [vmem:[%s12 + $0x36c] sm:$0xff]
    %v1879 = vld [vmem:[%s12 + $0x374] sm:$0xff]
    %v1880 = vld [vmem:[%s12 + $0x37c] sm:$0xf]
    %v1881 = vld [vmem:[%s13] sm:$0x7f]
    %v1883 = vlaneseq
    %v1884 = vshrl.u32 %v1883, 7
    %v1885 = vsub.s32 0, %v1884
    %v1886 = vrot.slane %v1881, %v1885
    %v1887 = vlaneseq
    %v1888 = vshrl.u32 %v1887, 7
    %v1889 = vsub.s32 1, %v1888
    %v1890 = vrot.slane %v1881, %v1889
    %v1891 = vlaneseq
    %v1892 = vshrl.u32 %v1891, 7
    %v1893 = vsub.s32 2, %v1892
    %v1894 = vrot.slane %v1881, %v1893
    %v1895 = vlaneseq
    %v1896 = vshrl.u32 %v1895, 7
    %v1897 = vsub.s32 3, %v1896
    %v1898 = vrot.slane %v1881, %v1897
    %v1899 = vlaneseq
    %v1900 = vshrl.u32 %v1899, 7
    %v1901 = vsub.s32 4, %v1900
    %v1902 = vrot.slane %v1881, %v1901
    %v1903 = vlaneseq
    %v1904 = vshrl.u32 %v1903, 7
    %v1905 = vsub.s32 5, %v1904
    %v1906 = vrot.slane %v1881, %v1905
    %v1907 = vlaneseq
    %v1908 = vshrl.u32 %v1907, 7
    %v1909 = vsub.s32 6, %v1908
    %v1910 = vrot.slane %v1881, %v1909
    %v2046 = vunpack.c.l.b16 %v1753
    %v2047 = vunpack.c.h.b16 %v1753
    %v2048 = vunpack.c.l.b16 %v1754
    %v2049 = vunpack.c.h.b16 %v1754
    %v2050 = vunpack.c.l.b16 %v1755
    %v2051 = vunpack.c.h.b16 %v1755
    %v2052 = vunpack.c.l.b16 %v1756
    %v2053 = vunpack.c.l.b16 %v1757
    %v2054 = vunpack.c.h.b16 %v1757
    %v2055 = vunpack.c.l.b16 %v1758
    %v2056 = vunpack.c.h.b16 %v1758
    %v2057 = vunpack.c.l.b16 %v1759
    %v2058 = vunpack.c.h.b16 %v1759
    %v2059 = vunpack.c.l.b16 %v1760
    %v2060 = vunpack.c.l.b16 %v1761
    %v2061 = vunpack.c.h.b16 %v1761
    %v2062 = vunpack.c.l.b16 %v1762
    %v2063 = vunpack.c.h.b16 %v1762
    %v2064 = vunpack.c.l.b16 %v1763
    %v2065 = vunpack.c.h.b16 %v1763
    %v2066 = vunpack.c.l.b16 %v1764
    %v2067 = vunpack.c.l.b16 %v1765
    %v2068 = vunpack.c.h.b16 %v1765
    %v2069 = vunpack.c.l.b16 %v1766
    %v2070 = vunpack.c.h.b16 %v1766
    %v2071 = vunpack.c.l.b16 %v1767
    %v2072 = vunpack.c.h.b16 %v1767
    %v2073 = vunpack.c.l.b16 %v1768
    %v2074 = vunpack.c.l.b16 %v1769
    %v2075 = vunpack.c.h.b16 %v1769
    %v2076 = vunpack.c.l.b16 %v1770
    %v2077 = vunpack.c.h.b16 %v1770
    %v2078 = vunpack.c.l.b16 %v1771
    %v2079 = vunpack.c.h.b16 %v1771
    %v2080 = vunpack.c.l.b16 %v1772
    %v2081 = vunpack.c.l.b16 %v1773
    %v2082 = vunpack.c.h.b16 %v1773
    %v2083 = vunpack.c.l.b16 %v1774
    %v2084 = vunpack.c.h.b16 %v1774
    %v2085 = vunpack.c.l.b16 %v1775
    %v2086 = vunpack.c.h.b16 %v1775
    %v2087 = vunpack.c.l.b16 %v1776
    %v2088 = vunpack.c.l.b16 %v1777
    %v2089 = vunpack.c.h.b16 %v1777
    %v2090 = vunpack.c.l.b16 %v1778
    %v2091 = vunpack.c.h.b16 %v1778
    %v2092 = vunpack.c.l.b16 %v1779
    %v2093 = vunpack.c.h.b16 %v1779
    %v2094 = vunpack.c.l.b16 %v1780
    %v2095 = vunpack.c.l.b16 %v1781
    %v2096 = vunpack.c.h.b16 %v1781
    %v2097 = vunpack.c.l.b16 %v1782
    %v2098 = vunpack.c.h.b16 %v1782
    %v2099 = vunpack.c.l.b16 %v1783
    %v2100 = vunpack.c.h.b16 %v1783
    %v2101 = vunpack.c.l.b16 %v1784
    %v2102 = vunpack.c.l.b16 %v1785
    %v2103 = vunpack.c.h.b16 %v1785
    %v2104 = vunpack.c.l.b16 %v1786
    %v2105 = vunpack.c.h.b16 %v1786
    %v2106 = vunpack.c.l.b16 %v1787
    %v2107 = vunpack.c.h.b16 %v1787
    %v2108 = vunpack.c.l.b16 %v1788
    %v2109 = vunpack.c.l.b16 %v1789
    %v2110 = vunpack.c.h.b16 %v1789
    %v2111 = vunpack.c.l.b16 %v1790
    %v2112 = vunpack.c.h.b16 %v1790
    %v2113 = vunpack.c.l.b16 %v1791
    %v2114 = vunpack.c.h.b16 %v1791
    %v2115 = vunpack.c.l.b16 %v1792
    %v2116 = vunpack.c.l.b16 %v1793
    %v2117 = vunpack.c.h.b16 %v1793
    %v2118 = vunpack.c.l.b16 %v1794
    %v2119 = vunpack.c.h.b16 %v1794
    %v2120 = vunpack.c.l.b16 %v1795
    %v2121 = vunpack.c.h.b16 %v1795
    %v2122 = vunpack.c.l.b16 %v1796
    %v2123 = vunpack.c.l.b16 %v1797
    %v2124 = vunpack.c.h.b16 %v1797
    %v2125 = vunpack.c.l.b16 %v1798
    %v2126 = vunpack.c.h.b16 %v1798
    %v2127 = vunpack.c.l.b16 %v1799
    %v2128 = vunpack.c.h.b16 %v1799
    %v2129 = vunpack.c.l.b16 %v1800
    %v2130 = vunpack.c.l.b16 %v1801
    %v2131 = vunpack.c.h.b16 %v1801
    %v2132 = vunpack.c.l.b16 %v1802
    %v2133 = vunpack.c.h.b16 %v1802
    %v2134 = vunpack.c.l.b16 %v1803
    %v2135 = vunpack.c.h.b16 %v1803
    %v2136 = vunpack.c.l.b16 %v1804
    %v2137 = vunpack.c.l.b16 %v1805
    %v2138 = vunpack.c.h.b16 %v1805
    %v2139 = vunpack.c.l.b16 %v1806
    %v2140 = vunpack.c.h.b16 %v1806
    %v2141 = vunpack.c.l.b16 %v1807
    %v2142 = vunpack.c.h.b16 %v1807
    %v2143 = vunpack.c.l.b16 %v1808
    %v2144 = vunpack.c.l.b16 %v1809
    %v2145 = vunpack.c.h.b16 %v1809
    %v2146 = vunpack.c.l.b16 %v1810
    %v2147 = vunpack.c.h.b16 %v1810
    %v2148 = vunpack.c.l.b16 %v1811
    %v2149 = vunpack.c.h.b16 %v1811
    %v2150 = vunpack.c.l.b16 %v1812
    %v2151 = vunpack.c.l.b16 %v1813
    %v2152 = vunpack.c.h.b16 %v1813
    %v2153 = vunpack.c.l.b16 %v1814
    %v2154 = vunpack.c.h.b16 %v1814
    %v2155 = vunpack.c.l.b16 %v1815
    %v2156 = vunpack.c.h.b16 %v1815
    %v2157 = vunpack.c.l.b16 %v1816
    %v2158 = vunpack.c.l.b16 %v1817
    %v2159 = vunpack.c.h.b16 %v1817
    %v2160 = vunpack.c.l.b16 %v1818
    %v2161 = vunpack.c.h.b16 %v1818
    %v2162 = vunpack.c.l.b16 %v1819
    %v2163 = vunpack.c.h.b16 %v1819
    %v2164 = vunpack.c.l.b16 %v1820
    %v2165 = vunpack.c.l.b16 %v1821
    %v2166 = vunpack.c.h.b16 %v1821
    %v2167 = vunpack.c.l.b16 %v1822
    %v2168 = vunpack.c.h.b16 %v1822
    %v2169 = vunpack.c.l.b16 %v1823
    %v2170 = vunpack.c.h.b16 %v1823
    %v2171 = vunpack.c.l.b16 %v1824
    %v2172 = vunpack.c.l.b16 %v1825
    %v2173 = vunpack.c.h.b16 %v1825
    %v2174 = vunpack.c.l.b16 %v1826
    %v2175 = vunpack.c.h.b16 %v1826
    %v2176 = vunpack.c.l.b16 %v1827
    %v2177 = vunpack.c.h.b16 %v1827
    %v2178 = vunpack.c.l.b16 %v1828
    %v2179 = vunpack.c.l.b16 %v1829
    %v2180 = vunpack.c.h.b16 %v1829
    %v2181 = vunpack.c.l.b16 %v1830
    %v2182 = vunpack.c.h.b16 %v1830
    %v2183 = vunpack.c.l.b16 %v1831
    %v2184 = vunpack.c.h.b16 %v1831
    %v2185 = vunpack.c.l.b16 %v1832
    %v2186 = vunpack.c.l.b16 %v1833
    %v2187 = vunpack.c.h.b16 %v1833
    %v2188 = vunpack.c.l.b16 %v1834
    %v2189 = vunpack.c.h.b16 %v1834
    %v2190 = vunpack.c.l.b16 %v1835
    %v2191 = vunpack.c.h.b16 %v1835
    %v2192 = vunpack.c.l.b16 %v1836
    %v2193 = vunpack.c.l.b16 %v1837
    %v2194 = vunpack.c.h.b16 %v1837
    %v2195 = vunpack.c.l.b16 %v1838
    %v2196 = vunpack.c.h.b16 %v1838
    %v2197 = vunpack.c.l.b16 %v1839
    %v2198 = vunpack.c.h.b16 %v1839
    %v2199 = vunpack.c.l.b16 %v1840
    %v2200 = vunpack.c.l.b16 %v1841
    %v2201 = vunpack.c.h.b16 %v1841
    %v2202 = vunpack.c.l.b16 %v1842
    %v2203 = vunpack.c.h.b16 %v1842
    %v2204 = vunpack.c.l.b16 %v1843
    %v2205 = vunpack.c.h.b16 %v1843
    %v2206 = vunpack.c.l.b16 %v1844
    %v2207 = vunpack.c.l.b16 %v1845
    %v2208 = vunpack.c.h.b16 %v1845
    %v2209 = vunpack.c.l.b16 %v1846
    %v2210 = vunpack.c.h.b16 %v1846
    %v2211 = vunpack.c.l.b16 %v1847
    %v2212 = vunpack.c.h.b16 %v1847
    %v2213 = vunpack.c.l.b16 %v1848
    %v2214 = vunpack.c.l.b16 %v1849
    %v2215 = vunpack.c.h.b16 %v1849
    %v2216 = vunpack.c.l.b16 %v1850
    %v2217 = vunpack.c.h.b16 %v1850
    %v2218 = vunpack.c.l.b16 %v1851
    %v2219 = vunpack.c.h.b16 %v1851
    %v2220 = vunpack.c.l.b16 %v1852
    %v2221 = vunpack.c.l.b16 %v1853
    %v2222 = vunpack.c.h.b16 %v1853
    %v2223 = vunpack.c.l.b16 %v1854
    %v2224 = vunpack.c.h.b16 %v1854
    %v2225 = vunpack.c.l.b16 %v1855
    %v2226 = vunpack.c.h.b16 %v1855
    %v2227 = vunpack.c.l.b16 %v1856
    %v2228 = vunpack.c.l.b16 %v1857
    %v2229 = vunpack.c.h.b16 %v1857
    %v2230 = vunpack.c.l.b16 %v1858
    %v2231 = vunpack.c.h.b16 %v1858
    %v2232 = vunpack.c.l.b16 %v1859
    %v2233 = vunpack.c.h.b16 %v1859
    %v2234 = vunpack.c.l.b16 %v1860
    %v2235 = vunpack.c.l.b16 %v1861
    %v2236 = vunpack.c.h.b16 %v1861
    %v2237 = vunpack.c.l.b16 %v1862
    %v2238 = vunpack.c.h.b16 %v1862
    %v2239 = vunpack.c.l.b16 %v1863
    %v2240 = vunpack.c.h.b16 %v1863
    %v2241 = vunpack.c.l.b16 %v1864
    %v2242 = vunpack.c.l.b16 %v1865
    %v2243 = vunpack.c.h.b16 %v1865
    %v2244 = vunpack.c.l.b16 %v1866
    %v2245 = vunpack.c.h.b16 %v1866
    %v2246 = vunpack.c.l.b16 %v1867
    %v2247 = vunpack.c.h.b16 %v1867
    %v2248 = vunpack.c.l.b16 %v1868
    %v2249 = vunpack.c.l.b16 %v1869
    %v2250 = vunpack.c.h.b16 %v1869
    %v2251 = vunpack.c.l.b16 %v1870
    %v2252 = vunpack.c.h.b16 %v1870
    %v2253 = vunpack.c.l.b16 %v1871
    %v2254 = vunpack.c.h.b16 %v1871
    %v2255 = vunpack.c.l.b16 %v1872
    %v2256 = vunpack.c.l.b16 %v1873
    %v2257 = vunpack.c.h.b16 %v1873
    %v2258 = vunpack.c.l.b16 %v1874
    %v2259 = vunpack.c.h.b16 %v1874
    %v2260 = vunpack.c.l.b16 %v1875
    %v2261 = vunpack.c.h.b16 %v1875
    %v2262 = vunpack.c.l.b16 %v1876
    %v2263 = vunpack.c.l.b16 %v1877
    %v2264 = vunpack.c.h.b16 %v1877
    %v2265 = vunpack.c.l.b16 %v1878
    %v2266 = vunpack.c.h.b16 %v1878
    %v2267 = vunpack.c.l.b16 %v1879
    %v2268 = vunpack.c.h.b16 %v1879
    %v2269 = vunpack.c.l.b16 %v1880
    %v2270 = vpack.c.b16 %v2053, %v2046
    %v2271 = vpack.c.b16 %v2054, %v2047
    %v2272 = vpack.c.b16 %v2055, %v2048
    %v2273 = vpack.c.b16 %v2056, %v2049
    %v2274 = vpack.c.b16 %v2057, %v2050
    %v2275 = vpack.c.b16 %v2058, %v2051
    %v2276 = vpack.c.b16 %v2059, %v2052
    %v2277 = vpack.c.b16 %v2067, %v2060
    %v2278 = vpack.c.b16 %v2068, %v2061
    %v2279 = vpack.c.b16 %v2069, %v2062
    %v2280 = vpack.c.b16 %v2070, %v2063
    %v2281 = vpack.c.b16 %v2071, %v2064
    %v2282 = vpack.c.b16 %v2072, %v2065
    %v2283 = vpack.c.b16 %v2073, %v2066
    %v2284 = vpack.c.b16 %v2081, %v2074
    %v2285 = vpack.c.b16 %v2082, %v2075
    %v2286 = vpack.c.b16 %v2083, %v2076
    %v2287 = vpack.c.b16 %v2084, %v2077
    %v2288 = vpack.c.b16 %v2085, %v2078
    %v2289 = vpack.c.b16 %v2086, %v2079
    %v2290 = vpack.c.b16 %v2087, %v2080
    %v2291 = vpack.c.b16 %v2095, %v2088
    %v2292 = vpack.c.b16 %v2096, %v2089
    %v2293 = vpack.c.b16 %v2097, %v2090
    %v2294 = vpack.c.b16 %v2098, %v2091
    %v2295 = vpack.c.b16 %v2099, %v2092
    %v2296 = vpack.c.b16 %v2100, %v2093
    %v2297 = vpack.c.b16 %v2101, %v2094
    %v2298 = vpack.c.b16 %v2109, %v2102
    %v2299 = vpack.c.b16 %v2110, %v2103
    %v2300 = vpack.c.b16 %v2111, %v2104
    %v2301 = vpack.c.b16 %v2112, %v2105
    %v2302 = vpack.c.b16 %v2113, %v2106
    %v2303 = vpack.c.b16 %v2114, %v2107
    %v2304 = vpack.c.b16 %v2115, %v2108
    %v2305 = vpack.c.b16 %v2123, %v2116
    %v2306 = vpack.c.b16 %v2124, %v2117
    %v2307 = vpack.c.b16 %v2125, %v2118
    %v2308 = vpack.c.b16 %v2126, %v2119
    %v2309 = vpack.c.b16 %v2127, %v2120
    %v2310 = vpack.c.b16 %v2128, %v2121
    %v2311 = vpack.c.b16 %v2129, %v2122
    %v2312 = vpack.c.b16 %v2137, %v2130
    %v2313 = vpack.c.b16 %v2138, %v2131
    %v2314 = vpack.c.b16 %v2139, %v2132
    %v2315 = vpack.c.b16 %v2140, %v2133
    %v2316 = vpack.c.b16 %v2141, %v2134
    %v2317 = vpack.c.b16 %v2142, %v2135
    %v2318 = vpack.c.b16 %v2143, %v2136
    %v2319 = vpack.c.b16 %v2151, %v2144
    %v2320 = vpack.c.b16 %v2152, %v2145
    %v2321 = vpack.c.b16 %v2153, %v2146
    %v2322 = vpack.c.b16 %v2154, %v2147
    %v2323 = vpack.c.b16 %v2155, %v2148
    %v2324 = vpack.c.b16 %v2156, %v2149
    %v2325 = vpack.c.b16 %v2157, %v2150
    %v2326 = vpack.c.b16 %v2165, %v2158
    %v2327 = vpack.c.b16 %v2166, %v2159
    %v2328 = vpack.c.b16 %v2167, %v2160
    %v2329 = vpack.c.b16 %v2168, %v2161
    %v2330 = vpack.c.b16 %v2169, %v2162
    %v2331 = vpack.c.b16 %v2170, %v2163
    %v2332 = vpack.c.b16 %v2171, %v2164
    %v2333 = vpack.c.b16 %v2179, %v2172
    %v2334 = vpack.c.b16 %v2180, %v2173
    %v2335 = vpack.c.b16 %v2181, %v2174
    %v2336 = vpack.c.b16 %v2182, %v2175
    %v2337 = vpack.c.b16 %v2183, %v2176
    %v2338 = vpack.c.b16 %v2184, %v2177
    %v2339 = vpack.c.b16 %v2185, %v2178
    %v2340 = vpack.c.b16 %v2193, %v2186
    %v2341 = vpack.c.b16 %v2194, %v2187
    %v2342 = vpack.c.b16 %v2195, %v2188
    %v2343 = vpack.c.b16 %v2196, %v2189
    %v2344 = vpack.c.b16 %v2197, %v2190
    %v2345 = vpack.c.b16 %v2198, %v2191
    %v2346 = vpack.c.b16 %v2199, %v2192
    %v2347 = vpack.c.b16 %v2207, %v2200
    %v2348 = vpack.c.b16 %v2208, %v2201
    %v2349 = vpack.c.b16 %v2209, %v2202
    %v2350 = vpack.c.b16 %v2210, %v2203
    %v2351 = vpack.c.b16 %v2211, %v2204
    %v2352 = vpack.c.b16 %v2212, %v2205
    %v2353 = vpack.c.b16 %v2213, %v2206
    %v2354 = vpack.c.b16 %v2221, %v2214
    %v2355 = vpack.c.b16 %v2222, %v2215
    %v2356 = vpack.c.b16 %v2223, %v2216
    %v2357 = vpack.c.b16 %v2224, %v2217
    %v2358 = vpack.c.b16 %v2225, %v2218
    %v2359 = vpack.c.b16 %v2226, %v2219
    %v2360 = vpack.c.b16 %v2227, %v2220
    %v2361 = vpack.c.b16 %v2235, %v2228
    %v2362 = vpack.c.b16 %v2236, %v2229
    %v2363 = vpack.c.b16 %v2237, %v2230
    %v2364 = vpack.c.b16 %v2238, %v2231
    %v2365 = vpack.c.b16 %v2239, %v2232
    %v2366 = vpack.c.b16 %v2240, %v2233
    %v2367 = vpack.c.b16 %v2241, %v2234
    %v2368 = vpack.c.b16 %v2249, %v2242
    %v2369 = vpack.c.b16 %v2250, %v2243
    %v2370 = vpack.c.b16 %v2251, %v2244
    %v2371 = vpack.c.b16 %v2252, %v2245
    %v2372 = vpack.c.b16 %v2253, %v2246
    %v2373 = vpack.c.b16 %v2254, %v2247
    %v2374 = vpack.c.b16 %v2255, %v2248
    %v2375 = vpack.c.b16 %v2263, %v2256
    %v2376 = vpack.c.b16 %v2264, %v2257
    %v2377 = vpack.c.b16 %v2265, %v2258
    %v2378 = vpack.c.b16 %v2266, %v2259
    %v2379 = vpack.c.b16 %v2267, %v2260
    %v2380 = vpack.c.b16 %v2268, %v2261
    %v2381 = vpack.c.b16 %v2269, %v2262
    %2494 = vmatprep.subr.bf16.mxu0 %v2271
    %2495 = vmatpush1.bf16.msra.mxu0 %v2270
    %2496 = vmatprep.subr.bf16.mxu0 %v2278
    %2497 = vmatpush1.bf16.msra.mxu0 %v2277
    %2498 = vmatprep.subr.bf16.mxu0 %v2285
    %2499 = vmatpush1.bf16.msra.mxu0 %v2284
    %2500 = vmatprep.subr.bf16.mxu0 %v2292
    %2501 = vmatpush1.bf16.msra.mxu0 %v2291
    %2502 = vmatprep.subr.bf16.mxu0 %v2299
    %2503 = vmatpush1.bf16.msra.mxu0 %v2298
    %2504 = vmatprep.subr.bf16.mxu0 %v2306
    %2505 = vmatpush1.bf16.msra.mxu0 %v2305
    %2506 = vmatprep.subr.bf16.mxu0 %v2313
    %2507 = vmatpush1.bf16.msra.mxu0 %v2312
    %2508 = vmatprep.subr.bf16.mxu0 %v2320
    %2509 = vmatpush1.bf16.msra.mxu0 %v2319
    %2510 = vmatprep.subr.bf16.mxu0 %v2327
    %2511 = vmatpush1.bf16.msra.mxu0 %v2326
    %2512 = vmatprep.subr.bf16.mxu0 %v2334
    %2513 = vmatpush1.bf16.msra.mxu0 %v2333
    %2514 = vmatprep.subr.bf16.mxu0 %v2341
    %2515 = vmatpush1.bf16.msra.mxu0 %v2340
    %2516 = vmatprep.subr.bf16.mxu0 %v2348
    %2517 = vmatpush1.bf16.msra.mxu0 %v2347
    %2518 = vmatprep.subr.bf16.mxu0 %v2355
    %2519 = vmatpush1.bf16.msra.mxu0 %v2354
    %2520 = vmatprep.subr.bf16.mxu0 %v2362
    %2521 = vmatpush1.bf16.msra.mxu0 %v2361
    %2522 = vmatprep.subr.bf16.mxu0 %v2369
    %2523 = vmatpush1.bf16.msra.mxu0 %v2368
    %2524 = vmatprep.subr.bf16.mxu0 %v2376
    %2525 = vmatpush1.bf16.msra.mxu0 %v2375
    %2526 = vmatprep.mubr.bf16.mxu0 %v1752
    %2527 = vmatmul.mubr.bf16.gmra.mrb[0].mxu0 %v1751
    %v2528 = vpop.f32.mrb[0].mxu0
    %v2529 = vadd.f32 %v1886, %v2528
    %v2530 = vpop.f32.mrb[0].mxu0
    %v2531 = vadd.f32 %v1890, %v2530
    %v2532 = vpop.f32.mrb[0].mxu0
    %v2533 = vpop.f32.mrb[0].mxu0
    %2534 = vdwg.mxu0
    %2535 = vmatprep.subr.bf16.mxu0 %v2273
    %2536 = vmatpush1.bf16.msra.mxu0 %v2272
    %2537 = vmatprep.subr.bf16.mxu0 %v2280
    %2538 = vmatpush1.bf16.msra.mxu0 %v2279
    %2539 = vmatprep.subr.bf16.mxu0 %v2287
    %2540 = vmatpush1.bf16.msra.mxu0 %v2286
    %2541 = vmatprep.subr.bf16.mxu0 %v2294
    %2542 = vmatpush1.bf16.msra.mxu0 %v2293
    %2543 = vmatprep.subr.bf16.mxu0 %v2301
    %2544 = vmatpush1.bf16.msra.mxu0 %v2300
    %2545 = vmatprep.subr.bf16.mxu0 %v2308
    %2546 = vmatpush1.bf16.msra.mxu0 %v2307
    %2547 = vmatprep.subr.bf16.mxu0 %v2315
    %2548 = vmatpush1.bf16.msra.mxu0 %v2314
    %2549 = vmatprep.subr.bf16.mxu0 %v2322
    %2550 = vmatpush1.bf16.msra.mxu0 %v2321
    %2551 = vmatprep.subr.bf16.mxu0 %v2329
    %2552 = vmatpush1.bf16.msra.mxu0 %v2328
    %2553 = vmatprep.subr.bf16.mxu0 %v2336
    %2554 = vmatpush1.bf16.msra.mxu0 %v2335
    %2555 = vmatprep.subr.bf16.mxu0 %v2343
    %2556 = vmatpush1.bf16.msra.mxu0 %v2342
    %2557 = vmatprep.subr.bf16.mxu0 %v2350
    %2558 = vmatpush1.bf16.msra.mxu0 %v2349
    %2559 = vmatprep.subr.bf16.mxu0 %v2357
    %2560 = vmatpush1.bf16.msra.mxu0 %v2356
    %2561 = vmatprep.subr.bf16.mxu0 %v2364
    %2562 = vmatpush1.bf16.msra.mxu0 %v2363
    %2563 = vmatprep.subr.bf16.mxu0 %v2371
    %2564 = vmatpush1.bf16.msra.mxu0 %v2370
    %2565 = vmatprep.subr.bf16.mxu0 %v2378
    %2566 = vmatpush1.bf16.msra.mxu0 %v2377
    %2567 = vmatprep.mubr.bf16.mxu0 %v1752
    %2568 = vmatmul.mubr.bf16.gmra.mrb[0].mxu0 %v1751
    %v2569 = vpop.f32.mrb[0].mxu0
    %v2570 = vadd.f32 %v1894, %v2569
    %v2571 = vpop.f32.mrb[0].mxu0
    %v2572 = vadd.f32 %v1898, %v2571
    %v2573 = vpop.f32.mrb[0].mxu0
    %v2574 = vpop.f32.mrb[0].mxu0
    %2575 = vdwg.mxu0
    %2576 = vmatprep.subr.bf16.mxu0 %v2275
    %2577 = vmatpush1.bf16.msra.mxu0 %v2274
    %2578 = vmatprep.subr.bf16.mxu0 %v2282
    %2579 = vmatpush1.bf16.msra.mxu0 %v2281
    %2580 = vmatprep.subr.bf16.mxu0 %v2289
    %2581 = vmatpush1.bf16.msra.mxu0 %v2288
    %2582 = vmatprep.subr.bf16.mxu0 %v2296
    %2583 = vmatpush1.bf16.msra.mxu0 %v2295
    %2584 = vmatprep.subr.bf16.mxu0 %v2303
    %2585 = vmatpush1.bf16.msra.mxu0 %v2302
    %2586 = vmatprep.subr.bf16.mxu0 %v2310
    %2587 = vmatpush1.bf16.msra.mxu0 %v2309
    %2588 = vmatprep.subr.bf16.mxu0 %v2317
    %2589 = vmatpush1.bf16.msra.mxu0 %v2316
    %2590 = vmatprep.subr.bf16.mxu0 %v2324
    %2591 = vmatpush1.bf16.msra.mxu0 %v2323
    %2592 = vmatprep.subr.bf16.mxu0 %v2331
    %2593 = vmatpush1.bf16.msra.mxu0 %v2330
    %2594 = vmatprep.subr.bf16.mxu0 %v2338
    %2595 = vmatpush1.bf16.msra.mxu0 %v2337
    %2596 = vmatprep.subr.bf16.mxu0 %v2345
    %2597 = vmatpush1.bf16.msra.mxu0 %v2344
    %2598 = vmatprep.subr.bf16.mxu0 %v2352
    %2599 = vmatpush1.bf16.msra.mxu0 %v2351
    %2600 = vmatprep.subr.bf16.mxu0 %v2359
    %2601 = vmatpush1.bf16.msra.mxu0 %v2358
    %2602 = vmatprep.subr.bf16.mxu0 %v2366
    %2603 = vmatpush1.bf16.msra.mxu0 %v2365
    %2604 = vmatprep.subr.bf16.mxu0 %v2373
    %2605 = vmatpush1.bf16.msra.mxu0 %v2372
    %2606 = vmatprep.subr.bf16.mxu0 %v2380
    %2607 = vmatpush1.bf16.msra.mxu0 %v2379
    %2608 = vmatprep.mubr.bf16.mxu0 %v1752
    %2609 = vmatmul.mubr.bf16.gmra.mrb[0].mxu0 %v1751
    %v2610 = vpop.f32.mrb[0].mxu0
    %v2611 = vadd.f32 %v1902, %v2610
    %v2612 = vpop.f32.mrb[0].mxu0
    %v2613 = vadd.f32 %v1906, %v2612
    %v2614 = vpop.f32.mrb[0].mxu0
    %v2615 = vpop.f32.mrb[0].mxu0
    %2616 = vdwg.mxu0
    %2617 = vmatprep.subr.bf16.mxu0 0
    %2618 = vmatpush1.bf16.msra.mxu0 %v2276
    %2619 = vmatprep.subr.bf16.mxu0 0
    %2620 = vmatpush1.bf16.msra.mxu0 %v2283
    %2621 = vmatprep.subr.bf16.mxu0 0
    %2622 = vmatpush1.bf16.msra.mxu0 %v2290
    %2623 = vmatprep.subr.bf16.mxu0 0
    %2624 = vmatpush1.bf16.msra.mxu0 %v2297
    %2625 = vmatprep.subr.bf16.mxu0 0
    %2626 = vmatpush1.bf16.msra.mxu0 %v2304
    %2627 = vmatprep.subr.bf16.mxu0 0
    %2628 = vmatpush1.bf16.msra.mxu0 %v2311
    %2629 = vmatprep.subr.bf16.mxu0 0
    %2630 = vmatpush1.bf16.msra.mxu0 %v2318
    %2631 = vmatprep.subr.bf16.mxu0 0
    %2632 = vmatpush1.bf16.msra.mxu0 %v2325
    %2633 = vmatprep.subr.bf16.mxu0 0
    %2634 = vmatpush1.bf16.msra.mxu0 %v2332
    %2635 = vmatprep.subr.bf16.mxu0 0
    %2636 = vmatpush1.bf16.msra.mxu0 %v2339
    %2637 = vmatprep.subr.bf16.mxu0 0
    %2638 = vmatpush1.bf16.msra.mxu0 %v2346
    %2639 = vmatprep.subr.bf16.mxu0 0
    %2640 = vmatpush1.bf16.msra.mxu0 %v2353
    %2641 = vmatprep.subr.bf16.mxu0 0
    %2642 = vmatpush1.bf16.msra.mxu0 %v2360
    %2643 = vmatprep.subr.bf16.mxu0 0
    %2644 = vmatpush1.bf16.msra.mxu0 %v2367
    %2645 = vmatprep.subr.bf16.mxu0 0
    %2646 = vmatpush1.bf16.msra.mxu0 %v2374
    %2647 = vmatprep.subr.bf16.mxu0 0
    %2648 = vmatpush1.bf16.msra.mxu0 %v2381
    %2649 = vmatprep.mubr.bf16.mxu0 %v1752
    %2650 = vmatmul.mubr.bf16.gmra.mrb[0].mxu0 %v1751
    %v2651 = vpop.f32.mrb[0].mxu0
    %v2652 = vadd.f32 %v1910, %v2651
    %v2653 = vpop.f32.mrb[0].mxu0
    %v2654 = vpop.f32.mrb[0].mxu0
    %v2655 = vpop.f32.mrb[0].mxu0
    %2656 = vdwg.mxu0
    %v2657 = vxor.u32 %v2529, 2147483648
    %v2658 = vxor.u32 %v2531, 2147483648
    %v2659 = vxor.u32 %v2570, 2147483648
    %v2660 = vxor.u32 %v2572, 2147483648
    %v2661 = vxor.u32 %v2611, 2147483648
    %v2662 = vxor.u32 %v2613, 2147483648
    %v2663 = vxor.u32 %v2652, 2147483648
    %v2664 = vmul.f32 %v2657, 1.442695
    %v2665 = vpow.pop %v2664
    %v2666 = vmul.f32 %v2658, 1.442695
    %v2667 = vpow.pop %v2666
    %v2668 = vmul.f32 %v2659, 1.442695
    %v2669 = vpow.pop %v2668
    %v2670 = vmul.f32 %v2660, 1.442695
    %v2671 = vpow.pop %v2670
    %v2672 = vmul.f32 %v2661, 1.442695
    %v2673 = vpow.pop %v2672
    %v2674 = vmul.f32 %v2662, 1.442695
    %v2675 = vpow.pop %v2674
    %v2676 = vmul.f32 %v2663, 1.442695
    %v2677 = vpow.pop %v2676
    %v2678 = vadd.f32 %v2665, 1.0
    %v2679 = vadd.f32 %v2667, 1.0
    %v2680 = vadd.f32 %v2669, 1.0
    %v2681 = vadd.f32 %v2671, 1.0
    %v2682 = vadd.f32 %v2673, 1.0
    %v2683 = vadd.f32 %v2675, 1.0
    %v2684 = vadd.f32 %v2677, 1.0
    %v2685 = vrcp.pop %v2678
    %v2686 = vmul.f32 1.0, %v2685
    %v2687 = vrcp.pop %v2679
    %v2688 = vmul.f32 1.0, %v2687
    %v2689 = vrcp.pop %v2680
    %v2690 = vmul.f32 1.0, %v2689
    %v2691 = vrcp.pop %v2681
    %v2692 = vmul.f32 1.0, %v2691
    %v2693 = vrcp.pop %v2682
    %v2694 = vmul.f32 1.0, %v2693
    %v2695 = vrcp.pop %v2683
    %v2696 = vmul.f32 1.0, %v2695
    %v2697 = vrcp.pop %v2684
    %v2698 = vmul.f32 1.0, %v2697
    %2699 = vst [vmem:[#allocation2] sm:$0xff] %v2686
    %2700 = vst [vmem:[#allocation2 + $0x8] sm:$0xff] %v2688
    %2701 = vst [vmem:[#allocation2 + $0x10] sm:$0xff] %v2690
    %2702 = vst [vmem:[#allocation2 + $0x18] sm:$0xff] %v2692
    %2703 = vst [vmem:[#allocation2 + $0x20] sm:$0xff] %v2694
    %2704 = vst [vmem:[#allocation2 + $0x28] sm:$0xff] %v2696
    %2705 = vst.msk [vmem:[#allocation2 + $0x30] sm:$0xff] %vm679, %v2698
    %2706 = vst [vmem:[%s15] sm:$0xff] %v1339
    %2707 = vst [vmem:[%s15 + $0x8] sm:$0xff] %v1341
    // Predicated region
    $region58: #{mnist1_forward.1} parent=1 // pred_check
      _
    $region59: #{mnist1_forward.1} parent=1 // pred_check_branch
      %2709 = sbr.rel (0) target = $region61
    $region60: #{mnist1_forward.1} parent=1 // pred_region
      %s2711 = ssub.s32 896, 896
      %2712 = vsyncadd [#allocation3], %s2711
      %s2714 = sshll.u32 [#allocation2], 4
      %s2715 = int_to_ptr.vmem [resolvable:$true] %s2714
      %2717 = dma.vmem_to_hbm [thread:$0]  %s2715, 896, %s14, [#allocation3]
    $region61: #{mnist1_forward.1} parent=1 // pred_fallthru
      _
    // Predicated region
    $region62: #{mnist1_forward.1} parent=1 // pred_check
      _
    $region63: #{mnist1_forward.1} parent=1 // pred_check_branch
      %2719 = sbr.rel (0) target = $region65
    $region64: #{mnist1_forward.1} parent=1 // pred_region
      _
    $region65: #{mnist1_forward.1} parent=1 // pred_fallthru
      _
    // Predicated region
    $region66: #{mnist1_forward.1} parent=1 // pred_check
      _
    $region67: #{mnist1_forward.1} parent=1 // pred_check_branch
      %2721 = sbr.rel (0) target = $region69
    $region68: #{mnist1_forward.1} parent=1 // pred_region
      %2722 = dma.done [#allocation3], 896
    $region69: #{mnist1_forward.1} parent=1 // pred_fallthru
      _
    // Predicated region
    $region70: #{mnist1_forward.1} parent=1 // pred_check
      _
    $region71: #{mnist1_forward.1} parent=1 // pred_check_branch
      %2724 = sbr.rel (0) target = $region73
    $region72: #{mnist1_forward.1} parent=1 // pred_region
      _
    $region73: #{mnist1_forward.1} parent=1 // pred_fallthru
      _
    %2725 = vsyncpa [#allocation3], 1

</llo_original>
